<compile_context>
chip_gen: v5e
topology: v5e:2x2
jax: 0.10.0
libtpu: 0.0.40
codegen_flags: <defaults>
</compile_context>

<pallas_src>
import functools

import jax
import jax.numpy as jnp
import numpy as np
from jax.experimental import pallas as pl
from jax.experimental.pallas import tpu as pltpu


# ----------------------------------------------------------------------------- #
# Tiling helpers                                                                  #
# ----------------------------------------------------------------------------- #
def _flat_tiling(SF):
    """Tile the flattened spatial*token axis SF = S*T as (rows, LW) with LW a
    multiple of 128 (lane-dense) and rows tiled in multiples of 8 (sublane-dense)."""
    lw = SF
    for cand in (512, 256, 128):
        if SF % cand == 0:
            lw = cand
            break
    rows = SF // lw
    if rows % 16 == 0 and rows >= 32:
        rt = 16
    elif rows % 8 == 0 and rows >= 16:
        rt = 8
    else:
        rt = rows
    return lw, rows, rt


def _pick_spatial_tile(S):
    for t in (512, 256, 128):
        if S % t == 0 and S // t >= 2:
            return t
    return S


# ----------------------------------------------------------------------------- #
# Kernel bodies                                                                   #
# ----------------------------------------------------------------------------- #
def _mean_kernel(cams_ref, mean_ref, *, h, B):
    """Head mean.  cams_ref: (B*h, rt, LW)  ->  mean_ref: (B, rt, LW) f32."""
    inv_h = jnp.float32(1.0 / h)
    for b in range(B):                                     # B, h static -> unrolled
        acc = cams_ref[b * h].astype(jnp.float32)          # (rt, LW)
        for j in range(1, h):
            acc = acc + cams_ref[b * h + j].astype(jnp.float32)
        mean_ref[b] = acc * inv_h


def _blend_mean_kernel(cams_ref, coef_ref, out_ref, mean_ref, *, h, B):
    """Fused: head mean + mask blend of the second sample's heads.
    cams_ref/out_ref: (B*h, rt, LW) | coef_ref: (3, rt, LW) | mean_ref: (B, rt, LW).
    Blend (per element):  out = c2 * a2 + c1 * a1 + a0   (pure VPU FMA chain)."""
    inv_h = jnp.float32(1.0 / h)
    for b in range(B):
        acc = cams_ref[b * h].astype(jnp.float32)
        for j in range(1, h):
            acc = acc + cams_ref[b * h + j].astype(jnp.float32)
        mean_ref[b] = acc * inv_h

    if B >= 2:
        a2 = coef_ref[0].astype(jnp.float32)               # (rt, LW)
        a1 = coef_ref[1].astype(jnp.float32)
        a0 = coef_ref[2].astype(jnp.float32)
        for j in range(h):
            out_ref[j] = cams_ref[j]                       # first sample passes through
            c1 = cams_ref[j].astype(jnp.float32)
            c2 = cams_ref[h + j].astype(jnp.float32)
            out_ref[h + j] = (c2 * a2 + c1 * a1 + a0).astype(out_ref.dtype)
        for r in range(2 * h, B * h):                      # any extra rows pass through
            out_ref[r] = cams_ref[r]
    else:
        out_ref[...] = cams_ref[...]


def _group_sums_kernel(mean_ref, oh_ref, sums_ref, *, B):
    """Token-group sums of the head mean.
    mean_ref: (B, st, T) f32 | oh_ref: (B, 4, T) | sums_ref: (B, st, 4) f32."""
    for b in range(B):
        m = mean_ref[b]                                    # (st, T) f32
        oh = oh_ref[b].astype(jnp.float32)                 # (4, T)
        for g in range(4):
            w = oh[g:g + 1, :]                             # (1, T)
            sums_ref[b, :, g:g + 1] = jnp.sum(m * w, axis=-1, keepdims=True)


# ----------------------------------------------------------------------------- #
# pallas_call builders (traced inside the jitted wrappers)                        #
# ----------------------------------------------------------------------------- #
def _head_mean(cams, h):
    BH, S, T = cams.shape
    B = BH // h
    SF = S * T
    lw, rows, rt = _flat_tiling(SF)
    cams_f = cams.reshape(BH, rows, lw)                    # free bitcast (contiguous)
    mean_f = pl.pallas_call(
        functools.partial(_mean_kernel, h=h, B=B),
        out_shape=jax.ShapeDtypeStruct((B, rows, lw), jnp.float32),
        grid=(rows // rt,),
        in_specs=[pl.BlockSpec((BH, rt, lw), lambda i: (0, i, 0))],
        out_specs=pl.BlockSpec((B, rt, lw), lambda i: (0, i, 0)),
        compiler_params=pltpu.CompilerParams(dimension_semantics=("parallel",)),
    )(cams_f)
    return mean_f.reshape(B, S, T)


def _blend_and_mean(cams, coef, h):
    BH, S, T = cams.shape
    B = BH // h
    SF = S * T
    lw, rows, rt = _flat_tiling(SF)
    cams_f = cams.reshape(BH, rows, lw)
    coef_f = coef.reshape(3, rows, lw)
    out_f, mean_f = pl.pallas_call(
        functools.partial(_blend_mean_kernel, h=h, B=B),
        out_shape=(jax.ShapeDtypeStruct((BH, rows, lw), cams.dtype),
                   jax.ShapeDtypeStruct((B, rows, lw), jnp.float32)),
        grid=(rows // rt,),
        in_specs=[pl.BlockSpec((BH, rt, lw), lambda i: (0, i, 0)),
                  pl.BlockSpec((3, rt, lw), lambda i: (0, i, 0))],
        out_specs=(pl.BlockSpec((BH, rt, lw), lambda i: (0, i, 0)),
                   pl.BlockSpec((B, rt, lw), lambda i: (0, i, 0))),
        compiler_params=pltpu.CompilerParams(dimension_semantics=("parallel",)),
    )(cams_f, coef_f)
    return out_f.reshape(BH, S, T), mean_f.reshape(B, S, T)


def _group_sums(mean, group_onehot):
    B, S, T = mean.shape
    st = _pick_spatial_tile(S)
    return pl.pallas_call(
        functools.partial(_group_sums_kernel, B=B),
        out_shape=jax.ShapeDtypeStruct((B, S, 4), jnp.float32),
        grid=(S // st,),
        in_specs=[pl.BlockSpec((B, st, T), lambda i: (0, i, 0)),
                  pl.BlockSpec((B, 4, T), lambda i: (0, 0, 0))],
        out_specs=pl.BlockSpec((B, st, 4), lambda i: (0, i, 0)),
        compiler_params=pltpu.CompilerParams(dimension_semantics=("parallel",)),
    )(mean, group_onehot)


@functools.partial(jax.jit, static_argnames=("h",))
def _forward_nomask(cams, group_onehot, h):
    mean = _head_mean(cams, h)
    return _group_sums(mean, group_onehot)


@functools.partial(jax.jit, static_argnames=("h",))
def _forward_mask(cams, group_onehot, coef, h):
    new_cams, mean = _blend_and_mean(cams, coef, h)
    return new_cams, _group_sums(mean, group_onehot)


# ----------------------------------------------------------------------------- #
# Module state / glue                                                             #
# ----------------------------------------------------------------------------- #
def _nearest_resize_hw(x, out_hw):
    """Nearest-neighbour resize over the last two dims, F.interpolate(mode='nearest')
    index convention: src = floor(dst * in / out)."""
    H, W = x.shape[-2], x.shape[-1]
    oh, ow = out_hw
    ridx = (jnp.arange(oh) * H // oh).astype(jnp.int32)
    cidx = (jnp.arange(ow) * W // ow).astype(jnp.int32)
    return x[..., ridx, :][..., :, cidx]


class AttentionControl:
    def __init__(self, cams_size=64):
        self.token_index = None
        self.layer_num = 0
        self.cams_dict = {}
        self.cams_size = cams_size
        self.token_sub_index = None
        self.mask = None
        self._group_onehot = None        # (B, 4, T), cached at register_index
        self._coef_cache = {}            # tag -> (3, S*T) blend coefficients

    def register_index(self, token_index, token_sub_index=None):
        self.token_index = token_index
        self.layer_num = int(jnp.max(token_index))
        self.token_sub_index = token_sub_index
        self.cams_dict = {}
        self.mask = None
        self._coef_cache = {}
        # One-hot of (token_index == g+1) for groups g=0..3, built once, reused per call.
        self._group_onehot = jnp.stack(
            [(token_index == g + 1) for g in range(4)], axis=1).astype(jnp.float32)

    def register_mask(self, mask):
        self.mask = {}
        self._coef_cache = {}
        m = mask[None]                                        # (1, L, H, W)
        for i in [4096, 1024, 256, 64]:
            s = int(i ** 0.5)
            self.mask[i] = _nearest_resize_hw(m, (s, s))[0]   # (L, s, s)

    def clear(self):
        self.cams_dict = {}

    def _blend_coef(self, tag, S):
        """(3, S*T) coefficients s.t. new_c2 = c2*a2 + c1*a1 + a0, folding the per-layer
        spatial mask, token->layer gather and token validity.  Cached per tag (the mask
        and indices are registration-time constants).  Assumes each token maps to at
        most one layer, as in the reference usage."""
        if tag in self._coef_cache:
            return self._coef_cache[tag]
        sub = self.token_sub_index[0]                                        # (T,)
        L = self.layer_num
        layer_ids = jnp.arange(1, L + 1)
        sub_oh = (sub[None, :] == layer_ids[:, None]).astype(jnp.float32)    # (L, T)
        mask_tag = self.mask[tag][:L].reshape(L, S).astype(jnp.float32)      # (L, S)
        m_st = jnp.einsum("lt,ls->st", sub_oh, mask_tag)                     # (S, T)
        v_t = (jnp.sum(sub_oh, axis=0) > 0).astype(jnp.float32)[None, :]     # (1, T)
        a2 = (1.0 - v_t) + v_t * m_st
        a1 = v_t * (1.0 - m_st)
        a0 = 0.7 * v_t * m_st
        coef = jnp.stack([a2.reshape(-1), a1.reshape(-1), a0.reshape(-1)], axis=0)
        self._coef_cache[tag] = coef
        return coef

    def forward(self, cams, h):
        # cams: (B*h, S, T) f32 (bf16 also accepted: kernels upcast, sums stay f32)
        tag = cams.shape[1]
        BH, S, T = cams.shape

        if self.mask is None:
            new_cams = cams                                    # reference returns an
            stacked = _forward_nomask(cams, self._group_onehot, h)  # unmodified clone
        else:
            coef = self._blend_coef(tag, S)
            new_cams, stacked = _forward_mask(cams, self._group_onehot, coef, h)

        if tag in self.cams_dict:
            self.cams_dict[tag].append(stacked)
        else:
            self.cams_dict[tag] = [stacked]
        return new_cams

    __call__ = forward

    # TODO(synk): extract_cams() (bilinear resize + min/max normalization over the stored
    # dict) is post-processing outside forward() and is left in plain-JAX territory.


# ----------------------------------------------------------------------------- #
# Demo + correctness check                                                        #
# ----------------------------------------------------------------------------- #
if __name__ == "__main__":
    key = jax.random.PRNGKey(0)
    B, H, S, T = 2, 4, 256, 8            # tag = S = 256 (one of the module's resolutions)
    k1, k2 = jax.random.split(key)
    cams = jax.random.uniform(k1, (B * H, S, T), dtype=jnp.float32)
    token_index = jnp.array([[0, 1, 2, 3, 4, 1, 2, 0],
                             [0, 2, 1, 4, 3, 2, 1, 0]], dtype=jnp.int32)
    token_sub_index = jnp.array([[0, 1, 1, 2, 3, 4, 2, 0],
                                 [0, 2, 1, 4, 3, 2, 1, 0]], dtype=jnp.int32)
    mask0 = (jax.random.uniform(k2, (4, 64, 64)) > 0.5).astype(jnp.float32)

    ctrl = AttentionControl(cams_size=64)
    ctrl.register_index(token_index, token_sub_index)

    # Path 1: no mask registered (head-mean + group-sums kernels only)
    out_nomask = jax.block_until_ready(ctrl.forward(cams, H))
    stacked0 = jax.block_until_ready(ctrl.cams_dict[S][0])

    # Path 2: mask registered (fused blend + head-mean kernel, then group sums)
    ctrl.register_mask(mask0)
    out = jax.block_until_ready(ctrl.forward(cams, H))
    stacked1 = jax.block_until_ready(ctrl.cams_dict[S][1])

    # ---------------- pure-numpy reference (mirrors the PyTorch code) ----------------
    cams_np = np.asarray(cams)
    ti_np = np.asarray(token_index)
    cams_mean = cams_np.reshape(B, H, S, T).mean(axis=1)                       # (B, S, T)
    ref_stack = np.stack(
        [(cams_mean * (ti_np == i + 1)[:, None, :]).sum(-1) for i in range(4)], axis=-1)

    ref_out = cams_np.copy()
    sub_np = np.asarray(token_sub_index)[0]
    mask_tag_np = np.asarray(ctrl.mask[S])                                     # (4, 16, 16)
    for i in range(ctrl.layer_num):
        ids = np.nonzero(sub_np == i + 1)[0]
        if ids.size == 0:
            continue
        m = mask_tag_np[i].reshape(-1)                                         # (S,)
        seg2 = ref_out[H:2 * H][:, :, ids]
        seg1 = ref_out[:H][:, :, ids]
        ref_out[H:2 * H, :, ids] = (seg2 + 0.7) * m[None, :, None] + seg1 * (1.0 - m)[None, :, None]

    np.testing.assert_allclose(np.asarray(out_nomask), cams_np, rtol=1e-5, atol=1e-5)
    np.testing.assert_allclose(np.asarray(stacked0), ref_stack, rtol=1e-5, atol=1e-5)
    np.testing.assert_allclose(np.asarray(stacked1), ref_stack, rtol=1e-5, atol=1e-5)
    np.testing.assert_allclose(np.asarray(out), ref_out, rtol=1e-5, atol=1e-5)

    print("KERNEL_OK")
</pallas_src>

<mosaic_0001>
module attributes {stable_mosaic.version = 11 : i64} {
  func.func @_mean_kernel(%arg0: i32, %arg1: memref<8x4x512xf32, #tpu.memory_space<vmem>>, %arg2: memref<2x4x512xf32, #tpu.memory_space<vmem>>) attributes {dimension_semantics = [#tpu.dimension_semantics<parallel>], iteration_bounds = array<i64: 1>, scalar_prefetch = 0 : i64, scratch_operands = 0 : i64, tpu.core_type = #tpu.core_type<tc>, window_params = [{transform_indices = @transform_0, window_bounds = array<i64: 8, 4, 512>}, {transform_indices = @transform_1, window_bounds = array<i64: 2, 4, 512>}]} {
    %c0 = arith.constant 0 : index
    %c0_0 = arith.constant 0 : index
    %c0_1 = arith.constant 0 : index
    %0 = vector.load %arg1[%c0, %c0_0, %c0_1] : memref<8x4x512xf32, #tpu.memory_space<vmem>>, vector<1x4x512xf32>
    %1 = vector.shape_cast %0 : vector<1x4x512xf32> to vector<4x512xf32>
    %c1 = arith.constant 1 : index
    %c0_2 = arith.constant 0 : index
    %c0_3 = arith.constant 0 : index
    %2 = vector.load %arg1[%c1, %c0_2, %c0_3] : memref<8x4x512xf32, #tpu.memory_space<vmem>>, vector<1x4x512xf32>
    %3 = vector.shape_cast %2 : vector<1x4x512xf32> to vector<4x512xf32>
    %4 = arith.addf %1, %3 : vector<4x512xf32>
    %c2 = arith.constant 2 : index
    %c0_4 = arith.constant 0 : index
    %c0_5 = arith.constant 0 : index
    %5 = vector.load %arg1[%c2, %c0_4, %c0_5] : memref<8x4x512xf32, #tpu.memory_space<vmem>>, vector<1x4x512xf32>
    %6 = vector.shape_cast %5 : vector<1x4x512xf32> to vector<4x512xf32>
    %7 = arith.addf %4, %6 : vector<4x512xf32>
    %c3 = arith.constant 3 : index
    %c0_6 = arith.constant 0 : index
    %c0_7 = arith.constant 0 : index
    %8 = vector.load %arg1[%c3, %c0_6, %c0_7] : memref<8x4x512xf32, #tpu.memory_space<vmem>>, vector<1x4x512xf32>
    %9 = vector.shape_cast %8 : vector<1x4x512xf32> to vector<4x512xf32>
    %10 = arith.addf %7, %9 : vector<4x512xf32>
    %cst = arith.constant 2.500000e-01 : f32
    %11 = vector.broadcast %cst : f32 to vector<4x512xf32>
    %12 = arith.mulf %10, %11 : vector<4x512xf32>
    %c0_8 = arith.constant 0 : index
    %c0_9 = arith.constant 0 : index
    %c0_10 = arith.constant 0 : index
    %13 = vector.load %arg2[%c0_8, %c0_9, %c0_10] : memref<2x4x512xf32, #tpu.memory_space<vmem>>, vector<1x4x512xf32>
    %14 = vector.shape_cast %13 : vector<1x4x512xf32> to vector<4x512xf32>
    %15 = vector.shape_cast %12 : vector<4x512xf32> to vector<1x4x512xf32>
    tpu.vector_store %arg2[%c0_8, %c0_9, %c0_10], %15 {strides = array<i32>} : memref<2x4x512xf32, #tpu.memory_space<vmem>>, vector<1x4x512xf32>,
    %c4 = arith.constant 4 : index
    %c0_11 = arith.constant 0 : index
    %c0_12 = arith.constant 0 : index
    %16 = vector.load %arg1[%c4, %c0_11, %c0_12] : memref<8x4x512xf32, #tpu.memory_space<vmem>>, vector<1x4x512xf32>
    %17 = vector.shape_cast %16 : vector<1x4x512xf32> to vector<4x512xf32>
    %c5 = arith.constant 5 : index
    %c0_13 = arith.constant 0 : index
    %c0_14 = arith.constant 0 : index
    %18 = vector.load %arg1[%c5, %c0_13, %c0_14] : memref<8x4x512xf32, #tpu.memory_space<vmem>>, vector<1x4x512xf32>
    %19 = vector.shape_cast %18 : vector<1x4x512xf32> to vector<4x512xf32>
    %20 = arith.addf %17, %19 : vector<4x512xf32>
    %c6 = arith.constant 6 : index
    %c0_15 = arith.constant 0 : index
    %c0_16 = arith.constant 0 : index
    %21 = vector.load %arg1[%c6, %c0_15, %c0_16] : memref<8x4x512xf32, #tpu.memory_space<vmem>>, vector<1x4x512xf32>
    %22 = vector.shape_cast %21 : vector<1x4x512xf32> to vector<4x512xf32>
    %23 = arith.addf %20, %22 : vector<4x512xf32>
    %c7 = arith.constant 7 : index
    %c0_17 = arith.constant 0 : index
    %c0_18 = arith.constant 0 : index
    %24 = vector.load %arg1[%c7, %c0_17, %c0_18] : memref<8x4x512xf32, #tpu.memory_space<vmem>>, vector<1x4x512xf32>
    %25 = vector.shape_cast %24 : vector<1x4x512xf32> to vector<4x512xf32>
    %26 = arith.addf %23, %25 : vector<4x512xf32>
    %cst_19 = arith.constant 2.500000e-01 : f32
    %27 = vector.broadcast %cst_19 : f32 to vector<4x512xf32>
    %28 = arith.mulf %26, %27 : vector<4x512xf32>
    %c1_20 = arith.constant 1 : index
    %c0_21 = arith.constant 0 : index
    %c0_22 = arith.constant 0 : index
    %29 = vector.load %arg2[%c1_20, %c0_21, %c0_22] : memref<2x4x512xf32, #tpu.memory_space<vmem>>, vector<1x4x512xf32>
    %30 = vector.shape_cast %29 : vector<1x4x512xf32> to vector<4x512xf32>
    %31 = vector.shape_cast %28 : vector<4x512xf32> to vector<1x4x512xf32>
    tpu.vector_store %arg2[%c1_20, %c0_21, %c0_22], %31 {strides = array<i32>} : memref<2x4x512xf32, #tpu.memory_space<vmem>>, vector<1x4x512xf32>,
    return
  }
  func.func @transform_0(%arg0: i32) -> (i32, i32, i32) {
    %c0_i32 = arith.constant 0 : i32
    %c0_i32_0 = arith.constant 0 : i32
    %c0_i32_1 = arith.constant 0 : i32
    return %c0_i32, %arg0, %c0_i32_0 : i32, i32, i32
  }
  func.func @transform_1(%arg0: i32) -> (i32, i32, i32) {
    %c0_i32 = arith.constant 0 : i32
    %c0_i32_0 = arith.constant 0 : i32
    %c0_i32_1 = arith.constant 0 : i32
    return %c0_i32, %arg0, %c0_i32_0 : i32, i32, i32
  }
}

module attributes {stable_mosaic.version = 11 : i64} {
  func.func @_group_sums_kernel(%arg0: i32, %arg1: memref<2x128x8xf32, #tpu.memory_space<vmem>>, %arg2: memref<2x4x8xf32, #tpu.memory_space<vmem>>, %arg3: memref<2x128x4xf32, #tpu.memory_space<vmem>>) attributes {dimension_semantics = [#tpu.dimension_semantics<parallel>], iteration_bounds = array<i64: 2>, scalar_prefetch = 0 : i64, scratch_operands = 0 : i64, tpu.core_type = #tpu.core_type<tc>, window_params = [{transform_indices = @transform_0, window_bounds = array<i64: 2, 128, 8>}, {pipeline_mode = #tpu.pipeline_mode<synchronous>, transform_indices = @transform_1, window_bounds = array<i64: 2, 4, 8>}, {transform_indices = @transform_2, window_bounds = array<i64: 2, 128, 4>}]} {
    %c0 = arith.constant 0 : index
    %c0_0 = arith.constant 0 : index
    %c0_1 = arith.constant 0 : index
    %0 = vector.load %arg1[%c0, %c0_0, %c0_1] : memref<2x128x8xf32, #tpu.memory_space<vmem>>, vector<1x128x8xf32>
    %1 = vector.shape_cast %0 : vector<1x128x8xf32> to vector<128x8xf32>
    %c0_2 = arith.constant 0 : index
    %c0_3 = arith.constant 0 : index
    %c0_4 = arith.constant 0 : index
    %2 = vector.load %arg2[%c0_2, %c0_3, %c0_4] : memref<2x4x8xf32, #tpu.memory_space<vmem>>, vector<1x4x8xf32>
    %3 = vector.shape_cast %2 : vector<1x4x8xf32> to vector<4x8xf32>
    %4 = vector.extract_strided_slice %3 {offsets = [0, 0], sizes = [1, 8], strides = [1, 1]} : vector<4x8xf32> to vector<1x8xf32>
    %5 = vector.broadcast %4 : vector<1x8xf32> to vector<128x8xf32>
    %6 = arith.mulf %1, %5 : vector<128x8xf32>
    %cst = arith.constant dense<0.000000e+00> : vector<128xf32>
    %7 = vector.multi_reduction <add>, %6, %cst [1] : vector<128x8xf32> to vector<128xf32>
    %8 = vector.shape_cast %7 : vector<128xf32> to vector<128x1xf32>
    %c0_5 = arith.constant 0 : index
    %c0_6 = arith.constant 0 : index
    %c0_7 = arith.constant 0 : index
    %9 = vector.load %arg3[%c0_5, %c0_6, %c0_7] : memref<2x128x4xf32, #tpu.memory_space<vmem>>, vector<1x128x1xf32>
    %10 = vector.shape_cast %9 : vector<1x128x1xf32> to vector<128x1xf32>
    %11 = vector.shape_cast %8 : vector<128x1xf32> to vector<1x128x1xf32>
    tpu.vector_store %arg3[%c0_5, %c0_6, %c0_7], %11 {strides = array<i32>} : memref<2x128x4xf32, #tpu.memory_space<vmem>>, vector<1x128x1xf32>,
    %12 = vector.extract_strided_slice %3 {offsets = [1, 0], sizes = [1, 8], strides = [1, 1]} : vector<4x8xf32> to vector<1x8xf32>
    %13 = vector.broadcast %12 : vector<1x8xf32> to vector<128x8xf32>
    %14 = arith.mulf %1, %13 : vector<128x8xf32>
    %cst_8 = arith.constant dense<0.000000e+00> : vector<128xf32>
    %15 = vector.multi_reduction <add>, %14, %cst_8 [1] : vector<128x8xf32> to vector<128xf32>
    %16 = vector.shape_cast %15 : vector<128xf32> to vector<128x1xf32>
    %c0_9 = arith.constant 0 : index
    %c0_10 = arith.constant 0 : index
    %c1 = arith.constant 1 : index
    %17 = vector.load %arg3[%c0_9, %c0_10, %c1] : memref<2x128x4xf32, #tpu.memory_space<vmem>>, vector<1x128x1xf32>
    %18 = vector.shape_cast %17 : vector<1x128x1xf32> to vector<128x1xf32>
    %19 = vector.shape_cast %16 : vector<128x1xf32> to vector<1x128x1xf32>
    tpu.vector_store %arg3[%c0_9, %c0_10, %c1], %19 {strides = array<i32>} : memref<2x128x4xf32, #tpu.memory_space<vmem>>, vector<1x128x1xf32>,
    %20 = vector.extract_strided_slice %3 {offsets = [2, 0], sizes = [1, 8], strides = [1, 1]} : vector<4x8xf32> to vector<1x8xf32>
    %21 = vector.broadcast %20 : vector<1x8xf32> to vector<128x8xf32>
    %22 = arith.mulf %1, %21 : vector<128x8xf32>
    %cst_11 = arith.constant dense<0.000000e+00> : vector<128xf32>
    %23 = vector.multi_reduction <add>, %22, %cst_11 [1] : vector<128x8xf32> to vector<128xf32>
    %24 = vector.shape_cast %23 : vector<128xf32> to vector<128x1xf32>
    %c0_12 = arith.constant 0 : index
    %c0_13 = arith.constant 0 : index
    %c2 = arith.constant 2 : index
    %25 = vector.load %arg3[%c0_12, %c0_13, %c2] : memref<2x128x4xf32, #tpu.memory_space<vmem>>, vector<1x128x1xf32>
    %26 = vector.shape_cast %25 : vector<1x128x1xf32> to vector<128x1xf32>
    %27 = vector.shape_cast %24 : vector<128x1xf32> to vector<1x128x1xf32>
    tpu.vector_store %arg3[%c0_12, %c0_13, %c2], %27 {strides = array<i32>} : memref<2x128x4xf32, #tpu.memory_space<vmem>>, vector<1x128x1xf32>,
    %28 = vector.extract_strided_slice %3 {offsets = [3, 0], sizes = [1, 8], strides = [1, 1]} : vector<4x8xf32> to vector<1x8xf32>
    %29 = vector.broadcast %28 : vector<1x8xf32> to vector<128x8xf32>
    %30 = arith.mulf %1, %29 : vector<128x8xf32>
    %cst_14 = arith.constant dense<0.000000e+00> : vector<128xf32>
    %31 = vector.multi_reduction <add>, %30, %cst_14 [1] : vector<128x8xf32> to vector<128xf32>
    %32 = vector.shape_cast %31 : vector<128xf32> to vector<128x1xf32>
    %c0_15 = arith.constant 0 : index
    %c0_16 = arith.constant 0 : index
    %c3 = arith.constant 3 : index
    %33 = vector.load %arg3[%c0_15, %c0_16, %c3] : memref<2x128x4xf32, #tpu.memory_space<vmem>>, vector<1x128x1xf32>
    %34 = vector.shape_cast %33 : vector<1x128x1xf32> to vector<128x1xf32>
    %35 = vector.shape_cast %32 : vector<128x1xf32> to vector<1x128x1xf32>
    tpu.vector_store %arg3[%c0_15, %c0_16, %c3], %35 {strides = array<i32>} : memref<2x128x4xf32, #tpu.memory_space<vmem>>, vector<1x128x1xf32>,
    %c1_17 = arith.constant 1 : index
    %c0_18 = arith.constant 0 : index
    %c0_19 = arith.constant 0 : index
    %36 = vector.load %arg1[%c1_17, %c0_18, %c0_19] : memref<2x128x8xf32, #tpu.memory_space<vmem>>, vector<1x128x8xf32>
    %37 = vector.shape_cast %36 : vector<1x128x8xf32> to vector<128x8xf32>
    %c1_20 = arith.constant 1 : index
    %c0_21 = arith.constant 0 : index
    %c0_22 = arith.constant 0 : index
    %38 = vector.load %arg2[%c1_20, %c0_21, %c0_22] : memref<2x4x8xf32, #tpu.memory_space<vmem>>, vector<1x4x8xf32>
    %39 = vector.shape_cast %38 : vector<1x4x8xf32> to vector<4x8xf32>
    %40 = vector.extract_strided_slice %39 {offsets = [0, 0], sizes = [1, 8], strides = [1, 1]} : vector<4x8xf32> to vector<1x8xf32>
    %41 = vector.broadcast %40 : vector<1x8xf32> to vector<128x8xf32>
    %42 = arith.mulf %37, %41 : vector<128x8xf32>
    %cst_23 = arith.constant dense<0.000000e+00> : vector<128xf32>
    %43 = vector.multi_reduction <add>, %42, %cst_23 [1] : vector<128x8xf32> to vector<128xf32>
    %44 = vector.shape_cast %43 : vector<128xf32> to vector<128x1xf32>
    %c1_24 = arith.constant 1 : index
    %c0_25 = arith.constant 0 : index
    %c0_26 = arith.constant 0 : index
    %45 = vector.load %arg3[%c1_24, %c0_25, %c0_26] : memref<2x128x4xf32, #tpu.memory_space<vmem>>, vector<1x128x1xf32>
    %46 = vector.shape_cast %45 : vector<1x128x1xf32> to vector<128x1xf32>
    %47 = vector.shape_cast %44 : vector<128x1xf32> to vector<1x128x1xf32>
    tpu.vector_store %arg3[%c1_24, %c0_25, %c0_26], %47 {strides = array<i32>} : memref<2x128x4xf32, #tpu.memory_space<vmem>>, vector<1x128x1xf32>,
    %48 = vector.extract_strided_slice %39 {offsets = [1, 0], sizes = [1, 8], strides = [1, 1]} : vector<4x8xf32> to vector<1x8xf32>
    %49 = vector.broadcast %48 : vector<1x8xf32> to vector<128x8xf32>
    %50 = arith.mulf %37, %49 : vector<128x8xf32>
    %cst_27 = arith.constant dense<0.000000e+00> : vector<128xf32>
    %51 = vector.multi_reduction <add>, %50, %cst_27 [1] : vector<128x8xf32> to vector<128xf32>
    %52 = vector.shape_cast %51 : vector<128xf32> to vector<128x1xf32>
    %c1_28 = arith.constant 1 : index
    %c0_29 = arith.constant 0 : index
    %c1_30 = arith.constant 1 : index
    %53 = vector.load %arg3[%c1_28, %c0_29, %c1_30] : memref<2x128x4xf32, #tpu.memory_space<vmem>>, vector<1x128x1xf32>
    %54 = vector.shape_cast %53 : vector<1x128x1xf32> to vector<128x1xf32>
    %55 = vector.shape_cast %52 : vector<128x1xf32> to vector<1x128x1xf32>
    tpu.vector_store %arg3[%c1_28, %c0_29, %c1_30], %55 {strides = array<i32>} : memref<2x128x4xf32, #tpu.memory_space<vmem>>, vector<1x128x1xf32>,
    %56 = vector.extract_strided_slice %39 {offsets = [2, 0], sizes = [1, 8], strides = [1, 1]} : vector<4x8xf32> to vector<1x8xf32>
    %57 = vector.broadcast %56 : vector<1x8xf32> to vector<128x8xf32>
    %58 = arith.mulf %37, %57 : vector<128x8xf32>
    %cst_31 = arith.constant dense<0.000000e+00> : vector<128xf32>
    %59 = vector.multi_reduction <add>, %58, %cst_31 [1] : vector<128x8xf32> to vector<128xf32>
    %60 = vector.shape_cast %59 : vector<128xf32> to vector<128x1xf32>
    %c1_32 = arith.constant 1 : index
    %c0_33 = arith.constant 0 : index
    %c2_34 = arith.constant 2 : index
    %61 = vector.load %arg3[%c1_32, %c0_33, %c2_34] : memref<2x128x4xf32, #tpu.memory_space<vmem>>, vector<1x128x1xf32>
    %62 = vector.shape_cast %61 : vector<1x128x1xf32> to vector<128x1xf32>
    %63 = vector.shape_cast %60 : vector<128x1xf32> to vector<1x128x1xf32>
    tpu.vector_store %arg3[%c1_32, %c0_33, %c2_34], %63 {strides = array<i32>} : memref<2x128x4xf32, #tpu.memory_space<vmem>>, vector<1x128x1xf32>,
    %64 = vector.extract_strided_slice %39 {offsets = [3, 0], sizes = [1, 8], strides = [1, 1]} : vector<4x8xf32> to vector<1x8xf32>
    %65 = vector.broadcast %64 : vector<1x8xf32> to vector<128x8xf32>
    %66 = arith.mulf %37, %65 : vector<128x8xf32>
    %cst_35 = arith.constant dense<0.000000e+00> : vector<128xf32>
    %67 = vector.multi_reduction <add>, %66, %cst_35 [1] : vector<128x8xf32> to vector<128xf32>
    %68 = vector.shape_cast %67 : vector<128xf32> to vector<128x1xf32>
    %c1_36 = arith.constant 1 : index
    %c0_37 = arith.constant 0 : index
    %c3_38 = arith.constant 3 : index
    %69 = vector.load %arg3[%c1_36, %c0_37, %c3_38] : memref<2x128x4xf32, #tpu.memory_space<vmem>>, vector<1x128x1xf32>
    %70 = vector.shape_cast %69 : vector<1x128x1xf32> to vector<128x1xf32>
    %71 = vector.shape_cast %68 : vector<128x1xf32> to vector<1x128x1xf32>
    tpu.vector_store %arg3[%c1_36, %c0_37, %c3_38], %71 {strides = array<i32>} : memref<2x128x4xf32, #tpu.memory_space<vmem>>, vector<1x128x1xf32>,
    return
  }
  func.func @transform_0(%arg0: i32) -> (i32, i32, i32) {
    %c0_i32 = arith.constant 0 : i32
    %c0_i32_0 = arith.constant 0 : i32
    %c0_i32_1 = arith.constant 0 : i32
    return %c0_i32, %arg0, %c0_i32_0 : i32, i32, i32
  }
  func.func @transform_1(%arg0: i32) -> (i32, i32, i32) {
    %c0_i32 = arith.constant 0 : i32
    %c0_i32_0 = arith.constant 0 : i32
    %c0_i32_1 = arith.constant 0 : i32
    %c0_i32_2 = arith.constant 0 : i32
    return %c0_i32, %c0_i32_0, %c0_i32_1 : i32, i32, i32
  }
  func.func @transform_2(%arg0: i32) -> (i32, i32, i32) {
    %c0_i32 = arith.constant 0 : i32
    %c0_i32_0 = arith.constant 0 : i32
    %c0_i32_1 = arith.constant 0 : i32
    return %c0_i32, %arg0, %c0_i32_0 : i32, i32, i32
  }
}

</mosaic_0001>

<llo_original>
// kernel: _forward_nomask.2
$region0: #{_forward_nomask.2}
  #allocation0 [shape = 'u32[]', space=smem, size = 0x4, offset = 0x4, fixed_abs, tag = 'smem constant byte address 0x4 - core index']
  #allocation1 [shape = 'u32[72,128]{1,0:T(1,128)}', space=vmem, size = 0x9000, scoped, tag = 'internal scratch']
  %s0 = inlined_call_operand.vmem [shape: f32[8,4,512], index: 0, kind: input, shape index: {}]
  %s1 = inlined_call_operand.vmem [shape: f32[2,4,512], index: 1, kind: output, shape index: {}]
  %s2 = sld [smem:[#allocation0]]
  $region14: #{_forward_nomask.2} parent=0
    _
  %s4 = ssub.s32 1, %s2
  %s5 = scalar_select 0, %s4, %s2
  // Predicated region
  $region2: #{_forward_nomask.2} parent=0 // pred_check
    _
  $region3: #{_forward_nomask.2} parent=0 // pred_check_branch
    %7 = sbr.rel (0) target = $region5
  $region4: #{_forward_nomask.2} parent=0 // pred_region
    _
  $region5: #{_forward_nomask.2} parent=0 // pred_fallthru
    _
  %v8 = vld [vmem:[%s0] sm:$0xff]
  %v9 = vld [vmem:[%s0 + $0x8] sm:$0xff]
  %s10 = scalar_lea.vmem %s0, 16
  %v11 = vld [vmem:[%s10] sm:$0xff]
  %v12 = vld [vmem:[%s10 + $0x8] sm:$0xff]
  %v13 = vadd.f32 %v8, %v11
  %v14 = vadd.f32 %v9, %v12
  %s15 = scalar_lea.vmem %s0, 32
  %v16 = vld [vmem:[%s15] sm:$0xff]
  %v17 = vld [vmem:[%s15 + $0x8] sm:$0xff]
  %v18 = vadd.f32 %v13, %v16
  %v19 = vadd.f32 %v14, %v17
  %s20 = scalar_lea.vmem %s0, 48
  %v21 = vld [vmem:[%s20] sm:$0xff]
  %v22 = vld [vmem:[%s20 + $0x8] sm:$0xff]
  %v23 = vadd.f32 %v18, %v21
  %v24 = vadd.f32 %v19, %v22
  %v25 = vmul.f32 %v23, 0.25
  %v26 = vmul.f32 %v24, 0.25
  %27 = vst [vmem:[%s1] sm:$0xff] %v25
  %28 = vst [vmem:[%s1 + $0x8] sm:$0xff] %v26
  %s29 = scalar_lea.vmem %s0, 64
  %v30 = vld [vmem:[%s29] sm:$0xff]
  %v31 = vld [vmem:[%s29 + $0x8] sm:$0xff]
  %s32 = scalar_lea.vmem %s0, 80
  %v33 = vld [vmem:[%s32] sm:$0xff]
  %v34 = vld [vmem:[%s32 + $0x8] sm:$0xff]
  %v35 = vadd.f32 %v30, %v33
  %v36 = vadd.f32 %v31, %v34
  %s37 = scalar_lea.vmem %s0, 96
  %v38 = vld [vmem:[%s37] sm:$0xff]
  %v39 = vld [vmem:[%s37 + $0x8] sm:$0xff]
  %v40 = vadd.f32 %v35, %v38
  %v41 = vadd.f32 %v36, %v39
  %s42 = scalar_lea.vmem %s0, 112
  %v43 = vld [vmem:[%s42] sm:$0xff]
  %v44 = vld [vmem:[%s42 + $0x8] sm:$0xff]
  %v45 = vadd.f32 %v40, %v43
  %v46 = vadd.f32 %v41, %v44
  %v47 = vmul.f32 %v45, 0.25
  %v48 = vmul.f32 %v46, 0.25
  %s49 = scalar_lea.vmem %s1, 16
  %50 = vst [vmem:[%s49] sm:$0xff] %v47
  %51 = vst [vmem:[%s49 + $0x8] sm:$0xff] %v48
  // Predicated region
  $region6: #{_forward_nomask.2} parent=0 // pred_check
    _
  $region7: #{_forward_nomask.2} parent=0 // pred_check_branch
    %53 = sbr.rel (0) target = $region9
  $region8: #{_forward_nomask.2} parent=0 // pred_region
    _
  $region9: #{_forward_nomask.2} parent=0 // pred_fallthru
    _
  // Predicated region
  $region10: #{_forward_nomask.2} parent=0 // pred_check
    _
  $region11: #{_forward_nomask.2} parent=0 // pred_check_branch
    %55 = sbr.rel (0) target = $region13
  $region12: #{_forward_nomask.2} parent=0 // pred_region
    _
  $region13: #{_forward_nomask.2} parent=0 // pred_fallthru
    _

// kernel: _forward_nomask.3
$region0: #{_forward_nomask.3}
  #allocation0 [shape = 'u32[]', space=smem, size = 0x4, offset = 0x4, fixed_abs, tag = 'smem constant byte address 0x4 - core index']
  #allocation1 [shape = 'u32[72,128]{1,0:T(1,128)}', space=vmem, size = 0x9000, scoped, tag = 'internal scratch']
  %s0 = inlined_call_operand.vmem [shape: f32[2,256,8], index: 0, kind: input, shape index: {}]
  %s1 = inlined_call_operand.vmem [shape: f32[2,4,8], index: 1, kind: input, shape index: {}]
  %s2 = inlined_call_operand.vmem [shape: f32[2,256,4], index: 2, kind: output, shape index: {}]
  %s3 = sld [smem:[#allocation0]]
  $region113: #{_forward_nomask.3} parent=0
    _
  %s5 = ssub.s32 1, %s3
  %s6 = scalar_select 0, %s5, %s3
  $region1: #{_forward_nomask.3} parent=0
    #allocation2 [shape = 'u8[262144]{0}', space=vmem, size = 0x40000, scoped, tag = 'input window, operand 0']
    #allocation3 [shape = 'u8[262144]{0}', space=vmem, size = 0x40000, scoped, tag = 'output window, operand 0']
    loop: start=0, step=1, limit=4
    $region2: #{_forward_nomask.3} parent=1 // loop_pre_header
      _
    $region3: #{_forward_nomask.3} parent=1 // loop_header
      %s8 = sphi 0, %s12
      %p9 = scmp.ge.s32.totalorder %s8, 4
      %s18 = sphi 0, %s20
      %s21 = sphi 0, %s18
      %s22 = sphi 0, %s21
      %s38 = sphi 0, %s22
      %s42 = sphi 0, %s42
      %s44 = sphi 0, %s42
      %s45 = sphi 0, %s44
      %s59 = sphi 0, %s45
      %s65 = sphi 0, %s67
      %s68 = sphi 0, %s65
      %s69 = sphi 0, %s68
      %s85 = sphi 0, %s69
    $region4: #{_forward_nomask.3} parent=1 // loop_header_branch
      %11 = sbr.rel (%p9) target = $region8
    $region5: #{_forward_nomask.3} parent=1 // loop_body
      %s13 = ssub.s32 %s8, 1
      %s14 = ssub.s32 %s8, 2
      %s15 = sadd.s32 %s8, 1
      %s16 = ssub.s32 %s8, %s15
      %p17 = scmp.eq.s32.totalorder %s16, 0
      %s19 = sadd.s32 %s18, 1
      %s20 = scalar_select %p17, %s18, %s19
      %p23 = pneg %p17
      %p24 = scmp.eq.s32.totalorder %s8, 1
      %p25 = por %p23, %p24
      %p26 = scmp.ne.s32.totalorder %s18, %s21
      %p27 = scmp.eq.s32.totalorder %s8, 0
      %p28 = por %p26, %p27
      %p29 = scmp.ne.s32.totalorder %s18, %s21
      %p30 = scmp.eq.s32.totalorder %s13, 1
      %p31 = por %p29, %p30
      %p32 = scmp.ne.s32.totalorder %s21, %s22
      %p33 = scmp.eq.s32.totalorder %s13, 0
      %p34 = por %p32, %p33
      %p35 = scmp.ne.s32.totalorder %s21, %s22
      %p36 = scmp.eq.s32.totalorder %s14, 1
      %p37 = por %p35, %p36
      %p39 = scmp.ne.s32.totalorder %s22, %s38
      %p40 = scmp.eq.s32.totalorder %s14, 0
      %p41 = por %p39, %p40
      %s43 = sadd.s32 %s42, 1
      %p46 = scmp.eq.s32.totalorder %s8, 1
      %p47 = scmp.ne.s32.totalorder %s42, %s44
      %p48 = scmp.eq.s32.totalorder %s8, 0
      %p49 = por %p47, %p48
      %p50 = scmp.ne.s32.totalorder %s42, %s44
      %p51 = scmp.eq.s32.totalorder %s13, 1
      %p52 = por %p50, %p51
      %p53 = scmp.ne.s32.totalorder %s44, %s45
      %p54 = scmp.eq.s32.totalorder %s13, 0
      %p55 = por %p53, %p54
      %p56 = scmp.ne.s32.totalorder %s44, %s45
      %p57 = scmp.eq.s32.totalorder %s14, 1
      %p58 = por %p56, %p57
      %p60 = scmp.ne.s32.totalorder %s45, %s59
      %p61 = scmp.eq.s32.totalorder %s14, 0
      %p62 = por %p60, %p61
      %s63 = ssub.s32 %s8, %s15
      %p64 = scmp.eq.s32.totalorder %s63, 0
      %s66 = sadd.s32 %s65, 1
      %s67 = scalar_select %p64, %s65, %s66
      %p70 = pneg %p64
      %p71 = scmp.eq.s32.totalorder %s8, 1
      %p72 = por %p70, %p71
      %p73 = scmp.ne.s32.totalorder %s65, %s68
      %p74 = scmp.eq.s32.totalorder %s8, 0
      %p75 = por %p73, %p74
      %p76 = scmp.ne.s32.totalorder %s65, %s68
      %p77 = scmp.eq.s32.totalorder %s13, 1
      %p78 = por %p76, %p77
      %p79 = scmp.ne.s32.totalorder %s68, %s69
      %p80 = scmp.eq.s32.totalorder %s13, 0
      %p81 = por %p79, %p80
      %p82 = scmp.ne.s32.totalorder %s68, %s69
      %p83 = scmp.eq.s32.totalorder %s14, 1
      %p84 = por %p82, %p83
      %p86 = scmp.ne.s32.totalorder %s69, %s85
      %p87 = scmp.eq.s32.totalorder %s14, 0
      %p88 = por %p86, %p87
      %p89 = scmp.le.s32.totalorder 1, %s8
      %p90 = scmp.lt.s32.totalorder %s8, 3
      %p91 = pnand %p89, %p90
      %p92 = pneg %p91
      // Predicated region
      $region9: #{_forward_nomask.3} parent=5 // pred_check
        _
      $region10: #{_forward_nomask.3} parent=5 // pred_check_branch
        %94 = sbr.rel (%p91) target = $region12
      $region11: #{_forward_nomask.3} parent=5 // pred_region
        %s95 = ssub.s32 %s8, 1
        // Predicated region
        $region13: #{_forward_nomask.3} parent=11 // pred_check
          %p96 = pneg %p55
        $region14: #{_forward_nomask.3} parent=11 // pred_check_branch
          %98 = sbr.rel (%p96) target = $region16
        $region15: #{_forward_nomask.3} parent=11 // pred_region
          _
        $region16: #{_forward_nomask.3} parent=11 // pred_fallthru
          _
      $region12: #{_forward_nomask.3} parent=5 // pred_fallthru
        _
      %p99 = scmp.lt.s32.totalorder %s8, 2
      // Predicated region
      $region17: #{_forward_nomask.3} parent=5 // pred_check
        %p100 = pneg %p99
      $region18: #{_forward_nomask.3} parent=5 // pred_check_branch
        %102 = sbr.rel (%p100) target = $region20
      $region19: #{_forward_nomask.3} parent=5 // pred_region
        // Predicated region
        $region21: #{_forward_nomask.3} parent=19 // pred_check
          %p103 = pneg %p28
        $region22: #{_forward_nomask.3} parent=19 // pred_check_branch
          %105 = sbr.rel (%p103) target = $region24
        $region23: #{_forward_nomask.3} parent=19 // pred_region
          %s106 = sand.u32 %s18, 1
          %s107 = sand.u32 %s18, 1
          %s108 = smul.addr %s107, 256
          %s109 = scalar_lea.vmem [#allocation2], %s108
          %s110 = smul.u32 16, %s8
          %s111 = smul.addr %s110, 8
          %s112 = scalar_lea.vmem %s0, %s111
          // Predicated region
          $region25: #{_forward_nomask.3} parent=23 // pred_check
            _
          $region26: #{_forward_nomask.3} parent=23 // pred_check_branch
            %114 = sbr.rel (0) target = $region28
          $region27: #{_forward_nomask.3} parent=23 // pred_region
            // Predicated region
            $region29: #{_forward_nomask.3} parent=27 // pred_check
              _
            $region30: #{_forward_nomask.3} parent=27 // pred_check_branch
              %116 = sbr.rel (0) target = $region32
            $region31: #{_forward_nomask.3} parent=27 // pred_region
              // Predicated region
              $region44: #{_forward_nomask.3} parent=31 // pred_check
                _
              $region45: #{_forward_nomask.3} parent=31 // pred_check_branch
                %194 = sbr.rel (0) target = $region47
              $region46: #{_forward_nomask.3} parent=31 // pred_region
                loop: start=0, step=1, limit=1
                $region48: #{_forward_nomask.3} parent=46 // loop_pre_header
                  _
                $region49: #{_forward_nomask.3} parent=46 // loop_header
                  %s196 = sphi 0, %s200
                  %p197 = scmp.ge.s32.totalorder %s196, 1
                  %s201 = sphi %s112, %s112
                  %s202 = sphi %s109, %s109
                $region50: #{_forward_nomask.3} parent=46 // loop_header_branch
                  %199 = sbr.rel (%p197) target = $region54
                $region51: #{_forward_nomask.3} parent=46 // loop_body
                  %v203 = vld [vmem:[%s201] sm:$0xff]
                  %204 = vst [vmem:[%s202] sm:$0xff] %v203
                  %v205 = vld [vmem:[%s201 + $0x8] sm:$0xff]
                  %206 = vst [vmem:[%s202 + $0x8] sm:$0xff] %v205
                  %v207 = vld [vmem:[%s201 + $0x10] sm:$0xff]
                  %208 = vst [vmem:[%s202 + $0x10] sm:$0xff] %v207
                  %v209 = vld [vmem:[%s201 + $0x18] sm:$0xff]
                  %210 = vst [vmem:[%s202 + $0x18] sm:$0xff] %v209
                  %v211 = vld [vmem:[%s201 + $0x20] sm:$0xff]
                  %212 = vst [vmem:[%s202 + $0x20] sm:$0xff] %v211
                  %v213 = vld [vmem:[%s201 + $0x28] sm:$0xff]
                  %214 = vst [vmem:[%s202 + $0x28] sm:$0xff] %v213
                  %v215 = vld [vmem:[%s201 + $0x30] sm:$0xff]
                  %216 = vst [vmem:[%s202 + $0x30] sm:$0xff] %v215
                  %v217 = vld [vmem:[%s201 + $0x38] sm:$0xff]
                  %218 = vst [vmem:[%s202 + $0x38] sm:$0xff] %v217
                  %v219 = vld [vmem:[%s201 + $0x40] sm:$0xff]
                  %220 = vst [vmem:[%s202 + $0x40] sm:$0xff] %v219
                  %v221 = vld [vmem:[%s201 + $0x48] sm:$0xff]
                  %222 = vst [vmem:[%s202 + $0x48] sm:$0xff] %v221
                  %v223 = vld [vmem:[%s201 + $0x50] sm:$0xff]
                  %224 = vst [vmem:[%s202 + $0x50] sm:$0xff] %v223
                  %v225 = vld [vmem:[%s201 + $0x58] sm:$0xff]
                  %226 = vst [vmem:[%s202 + $0x58] sm:$0xff] %v225
                  %v227 = vld [vmem:[%s201 + $0x60] sm:$0xff]
                  %228 = vst [vmem:[%s202 + $0x60] sm:$0xff] %v227
                  %v229 = vld [vmem:[%s201 + $0x68] sm:$0xff]
                  %230 = vst [vmem:[%s202 + $0x68] sm:$0xff] %v229
                  %v231 = vld [vmem:[%s201 + $0x70] sm:$0xff]
                  %232 = vst [vmem:[%s202 + $0x70] sm:$0xff] %v231
                  %v233 = vld [vmem:[%s201 + $0x78] sm:$0xff]
                  %234 = vst [vmem:[%s202 + $0x78] sm:$0xff] %v233
                  %v235 = vld [vmem:[%s201 + $0x100] sm:$0xff]
                  %236 = vst [vmem:[%s202 + $0x80] sm:$0xff] %v235
                  %v237 = vld [vmem:[%s201 + $0x108] sm:$0xff]
                  %238 = vst [vmem:[%s202 + $0x88] sm:$0xff] %v237
                  %v239 = vld [vmem:[%s201 + $0x110] sm:$0xff]
                  %240 = vst [vmem:[%s202 + $0x90] sm:$0xff] %v239
                  %v241 = vld [vmem:[%s201 + $0x118] sm:$0xff]
                  %242 = vst [vmem:[%s202 + $0x98] sm:$0xff] %v241
                  %v243 = vld [vmem:[%s201 + $0x120] sm:$0xff]
                  %244 = vst [vmem:[%s202 + $0xa0] sm:$0xff] %v243
                  %v245 = vld [vmem:[%s201 + $0x128] sm:$0xff]
                  %246 = vst [vmem:[%s202 + $0xa8] sm:$0xff] %v245
                  %v247 = vld [vmem:[%s201 + $0x130] sm:$0xff]
                  %248 = vst [vmem:[%s202 + $0xb0] sm:$0xff] %v247
                  %v249 = vld [vmem:[%s201 + $0x138] sm:$0xff]
                  %250 = vst [vmem:[%s202 + $0xb8] sm:$0xff] %v249
                  %v251 = vld [vmem:[%s201 + $0x140] sm:$0xff]
                  %252 = vst [vmem:[%s202 + $0xc0] sm:$0xff] %v251
                  %v253 = vld [vmem:[%s201 + $0x148] sm:$0xff]
                  %254 = vst [vmem:[%s202 + $0xc8] sm:$0xff] %v253
                  %v255 = vld [vmem:[%s201 + $0x150] sm:$0xff]
                  %256 = vst [vmem:[%s202 + $0xd0] sm:$0xff] %v255
                  %v257 = vld [vmem:[%s201 + $0x158] sm:$0xff]
                  %258 = vst [vmem:[%s202 + $0xd8] sm:$0xff] %v257
                  %v259 = vld [vmem:[%s201 + $0x160] sm:$0xff]
                  %260 = vst [vmem:[%s202 + $0xe0] sm:$0xff] %v259
                  %v261 = vld [vmem:[%s201 + $0x168] sm:$0xff]
                  %262 = vst [vmem:[%s202 + $0xe8] sm:$0xff] %v261
                  %v263 = vld [vmem:[%s201 + $0x170] sm:$0xff]
                  %264 = vst [vmem:[%s202 + $0xf0] sm:$0xff] %v263
                  %v265 = vld [vmem:[%s201 + $0x178] sm:$0xff]
                  %266 = vst [vmem:[%s202 + $0xf8] sm:$0xff] %v265
                $region52: #{_forward_nomask.3} parent=46 // loop_footer
                  %s200 = sadd.s32 1, %s196
                $region53: #{_forward_nomask.3} parent=46 // loop_footer_branch
                  %195 = sbr.rel target = $region49
                $region54: #{_forward_nomask.3} parent=46 // loop_exit
                  _
              $region47: #{_forward_nomask.3} parent=31 // pred_fallthru
                _
              // Predicated region
              $region55: #{_forward_nomask.3} parent=31 // pred_check
                _
              $region56: #{_forward_nomask.3} parent=31 // pred_check_branch
                %268 = sbr.rel target = $region58
              $region57: #{_forward_nomask.3} parent=31 // pred_region
                _
              $region58: #{_forward_nomask.3} parent=31 // pred_fallthru
                _
            $region32: #{_forward_nomask.3} parent=27 // pred_fallthru
              _
            // Predicated region
            $region33: #{_forward_nomask.3} parent=27 // pred_check
              _
            $region34: #{_forward_nomask.3} parent=27 // pred_check_branch
              %118 = sbr.rel target = $region36
            $region35: #{_forward_nomask.3} parent=27 // pred_region
              %s120 = ssub.s32 256, 1
              loop: start=0, step=1, limit=1
              $region37: #{_forward_nomask.3} parent=35 // loop_pre_header
                _
              $region38: #{_forward_nomask.3} parent=35 // loop_header
                %s122 = sphi 0, %s126
                %p123 = scmp.ge.s32.totalorder %s122, 1
                %s127 = sphi %s112, %s112
                %s128 = sphi %s109, %s109
              $region39: #{_forward_nomask.3} parent=35 // loop_header_branch
                %125 = sbr.rel (%p123) target = $region43
              $region40: #{_forward_nomask.3} parent=35 // loop_body
                %v129 = vld [vmem:[%s127] sm:%s120]
                %130 = vst [vmem:[%s128] sm:%s120] %v129
                %v131 = vld [vmem:[%s127 + $0x8] sm:%s120]
                %132 = vst [vmem:[%s128 + $0x8] sm:%s120] %v131
                %v133 = vld [vmem:[%s127 + $0x10] sm:%s120]
                %134 = vst [vmem:[%s128 + $0x10] sm:%s120] %v133
                %v135 = vld [vmem:[%s127 + $0x18] sm:%s120]
                %136 = vst [vmem:[%s128 + $0x18] sm:%s120] %v135
                %v137 = vld [vmem:[%s127 + $0x20] sm:%s120]
                %138 = vst [vmem:[%s128 + $0x20] sm:%s120] %v137
                %v139 = vld [vmem:[%s127 + $0x28] sm:%s120]
                %140 = vst [vmem:[%s128 + $0x28] sm:%s120] %v139
                %v141 = vld [vmem:[%s127 + $0x30] sm:%s120]
                %142 = vst [vmem:[%s128 + $0x30] sm:%s120] %v141
                %v143 = vld [vmem:[%s127 + $0x38] sm:%s120]
                %144 = vst [vmem:[%s128 + $0x38] sm:%s120] %v143
                %v145 = vld [vmem:[%s127 + $0x40] sm:%s120]
                %146 = vst [vmem:[%s128 + $0x40] sm:%s120] %v145
                %v147 = vld [vmem:[%s127 + $0x48] sm:%s120]
                %148 = vst [vmem:[%s128 + $0x48] sm:%s120] %v147
                %v149 = vld [vmem:[%s127 + $0x50] sm:%s120]
                %150 = vst [vmem:[%s128 + $0x50] sm:%s120] %v149
                %v151 = vld [vmem:[%s127 + $0x58] sm:%s120]
                %152 = vst [vmem:[%s128 + $0x58] sm:%s120] %v151
                %v153 = vld [vmem:[%s127 + $0x60] sm:%s120]
                %154 = vst [vmem:[%s128 + $0x60] sm:%s120] %v153
                %v155 = vld [vmem:[%s127 + $0x68] sm:%s120]
                %156 = vst [vmem:[%s128 + $0x68] sm:%s120] %v155
                %v157 = vld [vmem:[%s127 + $0x70] sm:%s120]
                %158 = vst [vmem:[%s128 + $0x70] sm:%s120] %v157
                %v159 = vld [vmem:[%s127 + $0x78] sm:%s120]
                %160 = vst [vmem:[%s128 + $0x78] sm:%s120] %v159
                %v161 = vld [vmem:[%s127 + $0x100] sm:%s120]
                %162 = vst [vmem:[%s128 + $0x80] sm:%s120] %v161
                %v163 = vld [vmem:[%s127 + $0x108] sm:%s120]
                %164 = vst [vmem:[%s128 + $0x88] sm:%s120] %v163
                %v165 = vld [vmem:[%s127 + $0x110] sm:%s120]
                %166 = vst [vmem:[%s128 + $0x90] sm:%s120] %v165
                %v167 = vld [vmem:[%s127 + $0x118] sm:%s120]
                %168 = vst [vmem:[%s128 + $0x98] sm:%s120] %v167
                %v169 = vld [vmem:[%s127 + $0x120] sm:%s120]
                %170 = vst [vmem:[%s128 + $0xa0] sm:%s120] %v169
                %v171 = vld [vmem:[%s127 + $0x128] sm:%s120]
                %172 = vst [vmem:[%s128 + $0xa8] sm:%s120] %v171
                %v173 = vld [vmem:[%s127 + $0x130] sm:%s120]
                %174 = vst [vmem:[%s128 + $0xb0] sm:%s120] %v173
                %v175 = vld [vmem:[%s127 + $0x138] sm:%s120]
                %176 = vst [vmem:[%s128 + $0xb8] sm:%s120] %v175
                %v177 = vld [vmem:[%s127 + $0x140] sm:%s120]
                %178 = vst [vmem:[%s128 + $0xc0] sm:%s120] %v177
                %v179 = vld [vmem:[%s127 + $0x148] sm:%s120]
                %180 = vst [vmem:[%s128 + $0xc8] sm:%s120] %v179
                %v181 = vld [vmem:[%s127 + $0x150] sm:%s120]
                %182 = vst [vmem:[%s128 + $0xd0] sm:%s120] %v181
                %v183 = vld [vmem:[%s127 + $0x158] sm:%s120]
                %184 = vst [vmem:[%s128 + $0xd8] sm:%s120] %v183
                %v185 = vld [vmem:[%s127 + $0x160] sm:%s120]
                %186 = vst [vmem:[%s128 + $0xe0] sm:%s120] %v185
                %v187 = vld [vmem:[%s127 + $0x168] sm:%s120]
                %188 = vst [vmem:[%s128 + $0xe8] sm:%s120] %v187
                %v189 = vld [vmem:[%s127 + $0x170] sm:%s120]
                %190 = vst [vmem:[%s128 + $0xf0] sm:%s120] %v189
                %v191 = vld [vmem:[%s127 + $0x178] sm:%s120]
                %192 = vst [vmem:[%s128 + $0xf8] sm:%s120] %v191
              $region41: #{_forward_nomask.3} parent=35 // loop_footer
                %s126 = sadd.s32 1, %s122
              $region42: #{_forward_nomask.3} parent=35 // loop_footer_branch
                %121 = sbr.rel target = $region38
              $region43: #{_forward_nomask.3} parent=35 // loop_exit
                _
            $region36: #{_forward_nomask.3} parent=27 // pred_fallthru
              _
          $region28: #{_forward_nomask.3} parent=23 // pred_fallthru
            _
          %269 = vnop
        $region24: #{_forward_nomask.3} parent=19 // pred_fallthru
          _
      $region20: #{_forward_nomask.3} parent=5 // pred_fallthru
        _
      %p270 = scmp.le.s32.totalorder 1, %s8
      %p271 = scmp.lt.s32.totalorder %s8, 3
      %p272 = pnand %p270, %p271
      %p273 = pneg %p272
      // Predicated region
      $region59: #{_forward_nomask.3} parent=5 // pred_check
        _
      $region60: #{_forward_nomask.3} parent=5 // pred_check_branch
        %275 = sbr.rel (%p272) target = $region62
      $region61: #{_forward_nomask.3} parent=5 // pred_region
        %s276 = ssub.s32 %s8, 1
        %s277 = sand.u32 %s21, 1
        %s278 = sand.u32 %s21, 1
        %s279 = smul.addr %s278, 256
        %s280 = scalar_lea.vmem [#allocation2], %s279
        // Predicated region
        $region63: #{_forward_nomask.3} parent=61 // pred_check
          %p281 = pneg %p34
        $region64: #{_forward_nomask.3} parent=61 // pred_check_branch
          %283 = sbr.rel (%p281) target = $region66
        $region65: #{_forward_nomask.3} parent=61 // pred_region
          _
        $region66: #{_forward_nomask.3} parent=61 // pred_fallthru
          _
        %s284 = sand.u32 %s21, 1
        %s285 = sand.u32 %s21, 1
        %s286 = smul.addr %s285, 256
        %s287 = scalar_lea.vmem [#allocation2], %s286
        %p288 = pneg %p34
        %p289 = pneg %p31
        %p290 = pneg %p55
        %p291 = pneg %p52
        %p292 = pneg %p81
        %p293 = pneg %p78
        %s294 = sand.u32 %s68, 1
        %s295 = sand.u32 %s68, 1
        %s296 = smul.addr %s295, 256
        %s297 = scalar_lea.vmem [#allocation3], %s296
        %s298 = smul.u32 16, %s13
        %s299 = smul.u32 16, %s13
        %v300 = vld [vmem:[%s280] sm:$0xff]
        %v301 = vld [vmem:[%s280 + $0x8] sm:$0xff]
        %v302 = vld [vmem:[%s280 + $0x10] sm:$0xff]
        %v303 = vld [vmem:[%s280 + $0x18] sm:$0xff]
        %v304 = vld [vmem:[%s280 + $0x20] sm:$0xff]
        %v305 = vld [vmem:[%s280 + $0x28] sm:$0xff]
        %v306 = vld [vmem:[%s280 + $0x30] sm:$0xff]
        %v307 = vld [vmem:[%s280 + $0x38] sm:$0xff]
        %v308 = vld [vmem:[%s280 + $0x40] sm:$0xff]
        %v309 = vld [vmem:[%s280 + $0x48] sm:$0xff]
        %v310 = vld [vmem:[%s280 + $0x50] sm:$0xff]
        %v311 = vld [vmem:[%s280 + $0x58] sm:$0xff]
        %v312 = vld [vmem:[%s280 + $0x60] sm:$0xff]
        %v313 = vld [vmem:[%s280 + $0x68] sm:$0xff]
        %v314 = vld [vmem:[%s280 + $0x70] sm:$0xff]
        %v315 = vld [vmem:[%s280 + $0x78] sm:$0xff]
        %v316 = vld [vmem:[%s1] sm:$0xf]
        %v317 = vperm.slane %v316, 0
        %v318 = vmul.f32 %v300, %v317
        %v319 = vmul.f32 %v301, %v317
        %v320 = vmul.f32 %v302, %v317
        %v321 = vmul.f32 %v303, %v317
        %v322 = vmul.f32 %v304, %v317
        %v323 = vmul.f32 %v305, %v317
        %v324 = vmul.f32 %v306, %v317
        %v325 = vmul.f32 %v307, %v317
        %v326 = vmul.f32 %v308, %v317
        %v327 = vmul.f32 %v309, %v317
        %v328 = vmul.f32 %v310, %v317
        %v329 = vmul.f32 %v311, %v317
        %v330 = vmul.f32 %v312, %v317
        %v331 = vmul.f32 %v313, %v317
        %v332 = vmul.f32 %v314, %v317
        %v333 = vmul.f32 %v315, %v317
        %vm334 = vcmask 64512
        %v335 = vsel %vm334, %v318, 0.0
        %336 = vadd.xlane.f32.xlu0 %v335
        %v337 = vpop.xlane.xlu0 %336
        %v338 = vsel %vm334, %v319, 0.0
        %339 = vadd.xlane.f32.xlu0 %v338
        %v340 = vpop.xlane.xlu0 %339
        %v341 = vsel %vm334, %v320, 0.0
        %342 = vadd.xlane.f32.xlu0 %v341
        %v343 = vpop.xlane.xlu0 %342
        %v344 = vsel %vm334, %v321, 0.0
        %345 = vadd.xlane.f32.xlu0 %v344
        %v346 = vpop.xlane.xlu0 %345
        %v347 = vsel %vm334, %v322, 0.0
        %348 = vadd.xlane.f32.xlu0 %v347
        %v349 = vpop.xlane.xlu0 %348
        %v350 = vsel %vm334, %v323, 0.0
        %351 = vadd.xlane.f32.xlu0 %v350
        %v352 = vpop.xlane.xlu0 %351
        %v353 = vsel %vm334, %v324, 0.0
        %354 = vadd.xlane.f32.xlu0 %v353
        %v355 = vpop.xlane.xlu0 %354
        %v356 = vsel %vm334, %v325, 0.0
        %357 = vadd.xlane.f32.xlu0 %v356
        %v358 = vpop.xlane.xlu0 %357
        %v359 = vsel %vm334, %v326, 0.0
        %360 = vadd.xlane.f32.xlu0 %v359
        %v361 = vpop.xlane.xlu0 %360
        %v362 = vsel %vm334, %v327, 0.0
        %363 = vadd.xlane.f32.xlu0 %v362
        %v364 = vpop.xlane.xlu0 %363
        %v365 = vsel %vm334, %v328, 0.0
        %366 = vadd.xlane.f32.xlu0 %v365
        %v367 = vpop.xlane.xlu0 %366
        %v368 = vsel %vm334, %v329, 0.0
        %369 = vadd.xlane.f32.xlu0 %v368
        %v370 = vpop.xlane.xlu0 %369
        %v371 = vsel %vm334, %v330, 0.0
        %372 = vadd.xlane.f32.xlu0 %v371
        %v373 = vpop.xlane.xlu0 %372
        %v374 = vsel %vm334, %v331, 0.0
        %375 = vadd.xlane.f32.xlu0 %v374
        %v376 = vpop.xlane.xlu0 %375
        %v377 = vsel %vm334, %v332, 0.0
        %378 = vadd.xlane.f32.xlu0 %v377
        %v379 = vpop.xlane.xlu0 %378
        %v380 = vsel %vm334, %v333, 0.0
        %381 = vadd.xlane.f32.xlu0 %v380
        %v382 = vpop.xlane.xlu0 %381
        %vm383 = vcmask 7168
        %384 = vst.msk [vmem:[%s297] sm:$0xff] %vm383, %v337
        %385 = vst.msk [vmem:[%s297 + $0x8] sm:$0xff] %vm383, %v340
        %386 = vst.msk [vmem:[%s297 + $0x10] sm:$0xff] %vm383, %v343
        %387 = vst.msk [vmem:[%s297 + $0x18] sm:$0xff] %vm383, %v346
        %388 = vst.msk [vmem:[%s297 + $0x20] sm:$0xff] %vm383, %v349
        %389 = vst.msk [vmem:[%s297 + $0x28] sm:$0xff] %vm383, %v352
        %390 = vst.msk [vmem:[%s297 + $0x30] sm:$0xff] %vm383, %v355
        %391 = vst.msk [vmem:[%s297 + $0x38] sm:$0xff] %vm383, %v358
        %392 = vst.msk [vmem:[%s297 + $0x40] sm:$0xff] %vm383, %v361
        %393 = vst.msk [vmem:[%s297 + $0x48] sm:$0xff] %vm383, %v364
        %394 = vst.msk [vmem:[%s297 + $0x50] sm:$0xff] %vm383, %v367
        %395 = vst.msk [vmem:[%s297 + $0x58] sm:$0xff] %vm383, %v370
        %396 = vst.msk [vmem:[%s297 + $0x60] sm:$0xff] %vm383, %v373
        %397 = vst.msk [vmem:[%s297 + $0x68] sm:$0xff] %vm383, %v376
        %398 = vst.msk [vmem:[%s297 + $0x70] sm:$0xff] %vm383, %v379
        %399 = vst.msk [vmem:[%s297 + $0x78] sm:$0xff] %vm383, %v382
        %v400 = vperm.slane %v316, 1
        %v401 = vmul.f32 %v300, %v400
        %v402 = vmul.f32 %v301, %v400
        %v403 = vmul.f32 %v302, %v400
        %v404 = vmul.f32 %v303, %v400
        %v405 = vmul.f32 %v304, %v400
        %v406 = vmul.f32 %v305, %v400
        %v407 = vmul.f32 %v306, %v400
        %v408 = vmul.f32 %v307, %v400
        %v409 = vmul.f32 %v308, %v400
        %v410 = vmul.f32 %v309, %v400
        %v411 = vmul.f32 %v310, %v400
        %v412 = vmul.f32 %v311, %v400
        %v413 = vmul.f32 %v312, %v400
        %v414 = vmul.f32 %v313, %v400
        %v415 = vmul.f32 %v314, %v400
        %v416 = vmul.f32 %v315, %v400
        %v417 = vsel %vm334, %v401, 0.0
        %418 = vadd.xlane.f32.xlu0 %v417
        %v419 = vpop.xlane.xlu0 %418
        %v420 = vsel %vm334, %v402, 0.0
        %421 = vadd.xlane.f32.xlu0 %v420
        %v422 = vpop.xlane.xlu0 %421
        %v423 = vsel %vm334, %v403, 0.0
        %424 = vadd.xlane.f32.xlu0 %v423
        %v425 = vpop.xlane.xlu0 %424
        %v426 = vsel %vm334, %v404, 0.0
        %427 = vadd.xlane.f32.xlu0 %v426
        %v428 = vpop.xlane.xlu0 %427
        %v429 = vsel %vm334, %v405, 0.0
        %430 = vadd.xlane.f32.xlu0 %v429
        %v431 = vpop.xlane.xlu0 %430
        %v432 = vsel %vm334, %v406, 0.0
        %433 = vadd.xlane.f32.xlu0 %v432
        %v434 = vpop.xlane.xlu0 %433
        %v435 = vsel %vm334, %v407, 0.0
        %436 = vadd.xlane.f32.xlu0 %v435
        %v437 = vpop.xlane.xlu0 %436
        %v438 = vsel %vm334, %v408, 0.0
        %439 = vadd.xlane.f32.xlu0 %v438
        %v440 = vpop.xlane.xlu0 %439
        %v441 = vsel %vm334, %v409, 0.0
        %442 = vadd.xlane.f32.xlu0 %v441
        %v443 = vpop.xlane.xlu0 %442
        %v444 = vsel %vm334, %v410, 0.0
        %445 = vadd.xlane.f32.xlu0 %v444
        %v446 = vpop.xlane.xlu0 %445
        %v447 = vsel %vm334, %v411, 0.0
        %448 = vadd.xlane.f32.xlu0 %v447
        %v449 = vpop.xlane.xlu0 %448
        %v450 = vsel %vm334, %v412, 0.0
        %451 = vadd.xlane.f32.xlu0 %v450
        %v452 = vpop.xlane.xlu0 %451
        %v453 = vsel %vm334, %v413, 0.0
        %454 = vadd.xlane.f32.xlu0 %v453
        %v455 = vpop.xlane.xlu0 %454
        %v456 = vsel %vm334, %v414, 0.0
        %457 = vadd.xlane.f32.xlu0 %v456
        %v458 = vpop.xlane.xlu0 %457
        %v459 = vsel %vm334, %v415, 0.0
        %460 = vadd.xlane.f32.xlu0 %v459
        %v461 = vpop.xlane.xlu0 %460
        %v462 = vsel %vm334, %v416, 0.0
        %463 = vadd.xlane.f32.xlu0 %v462
        %v464 = vpop.xlane.xlu0 %463
        %vm465 = vcmask 15368
        %466 = vst.msk [vmem:[%s297] sm:$0xff] %vm465, %v419
        %467 = vst.msk [vmem:[%s297 + $0x8] sm:$0xff] %vm465, %v422
        %468 = vst.msk [vmem:[%s297 + $0x10] sm:$0xff] %vm465, %v425
        %469 = vst.msk [vmem:[%s297 + $0x18] sm:$0xff] %vm465, %v428
        %470 = vst.msk [vmem:[%s297 + $0x20] sm:$0xff] %vm465, %v431
        %471 = vst.msk [vmem:[%s297 + $0x28] sm:$0xff] %vm465, %v434
        %472 = vst.msk [vmem:[%s297 + $0x30] sm:$0xff] %vm465, %v437
        %473 = vst.msk [vmem:[%s297 + $0x38] sm:$0xff] %vm465, %v440
        %474 = vst.msk [vmem:[%s297 + $0x40] sm:$0xff] %vm465, %v443
        %475 = vst.msk [vmem:[%s297 + $0x48] sm:$0xff] %vm465, %v446
        %476 = vst.msk [vmem:[%s297 + $0x50] sm:$0xff] %vm465, %v449
        %477 = vst.msk [vmem:[%s297 + $0x58] sm:$0xff] %vm465, %v452
        %478 = vst.msk [vmem:[%s297 + $0x60] sm:$0xff] %vm465, %v455
        %479 = vst.msk [vmem:[%s297 + $0x68] sm:$0xff] %vm465, %v458
        %480 = vst.msk [vmem:[%s297 + $0x70] sm:$0xff] %vm465, %v461
        %481 = vst.msk [vmem:[%s297 + $0x78] sm:$0xff] %vm465, %v464
        %v482 = vperm.slane %v316, 2
        %v483 = vmul.f32 %v300, %v482
        %v484 = vmul.f32 %v301, %v482
        %v485 = vmul.f32 %v302, %v482
        %v486 = vmul.f32 %v303, %v482
        %v487 = vmul.f32 %v304, %v482
        %v488 = vmul.f32 %v305, %v482
        %v489 = vmul.f32 %v306, %v482
        %v490 = vmul.f32 %v307, %v482
        %v491 = vmul.f32 %v308, %v482
        %v492 = vmul.f32 %v309, %v482
        %v493 = vmul.f32 %v310, %v482
        %v494 = vmul.f32 %v311, %v482
        %v495 = vmul.f32 %v312, %v482
        %v496 = vmul.f32 %v313, %v482
        %v497 = vmul.f32 %v314, %v482
        %v498 = vmul.f32 %v315, %v482
        %v499 = vsel %vm334, %v483, 0.0
        %500 = vadd.xlane.f32.xlu0 %v499
        %v501 = vpop.xlane.xlu0 %500
        %v502 = vsel %vm334, %v484, 0.0
        %503 = vadd.xlane.f32.xlu0 %v502
        %v504 = vpop.xlane.xlu0 %503
        %v505 = vsel %vm334, %v485, 0.0
        %506 = vadd.xlane.f32.xlu0 %v505
        %v507 = vpop.xlane.xlu0 %506
        %v508 = vsel %vm334, %v486, 0.0
        %509 = vadd.xlane.f32.xlu0 %v508
        %v510 = vpop.xlane.xlu0 %509
        %v511 = vsel %vm334, %v487, 0.0
        %512 = vadd.xlane.f32.xlu0 %v511
        %v513 = vpop.xlane.xlu0 %512
        %v514 = vsel %vm334, %v488, 0.0
        %515 = vadd.xlane.f32.xlu0 %v514
        %v516 = vpop.xlane.xlu0 %515
        %v517 = vsel %vm334, %v489, 0.0
        %518 = vadd.xlane.f32.xlu0 %v517
        %v519 = vpop.xlane.xlu0 %518
        %v520 = vsel %vm334, %v490, 0.0
        %521 = vadd.xlane.f32.xlu0 %v520
        %v522 = vpop.xlane.xlu0 %521
        %v523 = vsel %vm334, %v491, 0.0
        %524 = vadd.xlane.f32.xlu0 %v523
        %v525 = vpop.xlane.xlu0 %524
        %v526 = vsel %vm334, %v492, 0.0
        %527 = vadd.xlane.f32.xlu0 %v526
        %v528 = vpop.xlane.xlu0 %527
        %v529 = vsel %vm334, %v493, 0.0
        %530 = vadd.xlane.f32.xlu0 %v529
        %v531 = vpop.xlane.xlu0 %530
        %v532 = vsel %vm334, %v494, 0.0
        %533 = vadd.xlane.f32.xlu0 %v532
        %v534 = vpop.xlane.xlu0 %533
        %v535 = vsel %vm334, %v495, 0.0
        %536 = vadd.xlane.f32.xlu0 %v535
        %v537 = vpop.xlane.xlu0 %536
        %v538 = vsel %vm334, %v496, 0.0
        %539 = vadd.xlane.f32.xlu0 %v538
        %v540 = vpop.xlane.xlu0 %539
        %v541 = vsel %vm334, %v497, 0.0
        %542 = vadd.xlane.f32.xlu0 %v541
        %v543 = vpop.xlane.xlu0 %542
        %v544 = vsel %vm334, %v498, 0.0
        %545 = vadd.xlane.f32.xlu0 %v544
        %v546 = vpop.xlane.xlu0 %545
        %vm547 = vcmask 23568
        %548 = vst.msk [vmem:[%s297] sm:$0xff] %vm547, %v501
        %549 = vst.msk [vmem:[%s297 + $0x8] sm:$0xff] %vm547, %v504
        %550 = vst.msk [vmem:[%s297 + $0x10] sm:$0xff] %vm547, %v507
        %551 = vst.msk [vmem:[%s297 + $0x18] sm:$0xff] %vm547, %v510
        %552 = vst.msk [vmem:[%s297 + $0x20] sm:$0xff] %vm547, %v513
        %553 = vst.msk [vmem:[%s297 + $0x28] sm:$0xff] %vm547, %v516
        %554 = vst.msk [vmem:[%s297 + $0x30] sm:$0xff] %vm547, %v519
        %555 = vst.msk [vmem:[%s297 + $0x38] sm:$0xff] %vm547, %v522
        %556 = vst.msk [vmem:[%s297 + $0x40] sm:$0xff] %vm547, %v525
        %557 = vst.msk [vmem:[%s297 + $0x48] sm:$0xff] %vm547, %v528
        %558 = vst.msk [vmem:[%s297 + $0x50] sm:$0xff] %vm547, %v531
        %559 = vst.msk [vmem:[%s297 + $0x58] sm:$0xff] %vm547, %v534
        %560 = vst.msk [vmem:[%s297 + $0x60] sm:$0xff] %vm547, %v537
        %561 = vst.msk [vmem:[%s297 + $0x68] sm:$0xff] %vm547, %v540
        %562 = vst.msk [vmem:[%s297 + $0x70] sm:$0xff] %vm547, %v543
        %563 = vst.msk [vmem:[%s297 + $0x78] sm:$0xff] %vm547, %v546
        %v564 = vperm.slane %v316, 3
        %v565 = vmul.f32 %v300, %v564
        %v566 = vmul.f32 %v301, %v564
        %v567 = vmul.f32 %v302, %v564
        %v568 = vmul.f32 %v303, %v564
        %v569 = vmul.f32 %v304, %v564
        %v570 = vmul.f32 %v305, %v564
        %v571 = vmul.f32 %v306, %v564
        %v572 = vmul.f32 %v307, %v564
        %v573 = vmul.f32 %v308, %v564
        %v574 = vmul.f32 %v309, %v564
        %v575 = vmul.f32 %v310, %v564
        %v576 = vmul.f32 %v311, %v564
        %v577 = vmul.f32 %v312, %v564
        %v578 = vmul.f32 %v313, %v564
        %v579 = vmul.f32 %v314, %v564
        %v580 = vmul.f32 %v315, %v564
        %v581 = vsel %vm334, %v565, 0.0
        %582 = vadd.xlane.f32.xlu0 %v581
        %v583 = vpop.xlane.xlu0 %582
        %v584 = vsel %vm334, %v566, 0.0
        %585 = vadd.xlane.f32.xlu0 %v584
        %v586 = vpop.xlane.xlu0 %585
        %v587 = vsel %vm334, %v567, 0.0
        %588 = vadd.xlane.f32.xlu0 %v587
        %v589 = vpop.xlane.xlu0 %588
        %v590 = vsel %vm334, %v568, 0.0
        %591 = vadd.xlane.f32.xlu0 %v590
        %v592 = vpop.xlane.xlu0 %591
        %v593 = vsel %vm334, %v569, 0.0
        %594 = vadd.xlane.f32.xlu0 %v593
        %v595 = vpop.xlane.xlu0 %594
        %v596 = vsel %vm334, %v570, 0.0
        %597 = vadd.xlane.f32.xlu0 %v596
        %v598 = vpop.xlane.xlu0 %597
        %v599 = vsel %vm334, %v571, 0.0
        %600 = vadd.xlane.f32.xlu0 %v599
        %v601 = vpop.xlane.xlu0 %600
        %v602 = vsel %vm334, %v572, 0.0
        %603 = vadd.xlane.f32.xlu0 %v602
        %v604 = vpop.xlane.xlu0 %603
        %v605 = vsel %vm334, %v573, 0.0
        %606 = vadd.xlane.f32.xlu0 %v605
        %v607 = vpop.xlane.xlu0 %606
        %v608 = vsel %vm334, %v574, 0.0
        %609 = vadd.xlane.f32.xlu0 %v608
        %v610 = vpop.xlane.xlu0 %609
        %v611 = vsel %vm334, %v575, 0.0
        %612 = vadd.xlane.f32.xlu0 %v611
        %v613 = vpop.xlane.xlu0 %612
        %v614 = vsel %vm334, %v576, 0.0
        %615 = vadd.xlane.f32.xlu0 %v614
        %v616 = vpop.xlane.xlu0 %615
        %v617 = vsel %vm334, %v577, 0.0
        %618 = vadd.xlane.f32.xlu0 %v617
        %v619 = vpop.xlane.xlu0 %618
        %v620 = vsel %vm334, %v578, 0.0
        %621 = vadd.xlane.f32.xlu0 %v620
        %v622 = vpop.xlane.xlu0 %621
        %v623 = vsel %vm334, %v579, 0.0
        %624 = vadd.xlane.f32.xlu0 %v623
        %v625 = vpop.xlane.xlu0 %624
        %v626 = vsel %vm334, %v580, 0.0
        %627 = vadd.xlane.f32.xlu0 %v626
        %v628 = vpop.xlane.xlu0 %627
        %vm629 = vcmask 31768
        %630 = vst.msk [vmem:[%s297] sm:$0xff] %vm629, %v583
        %631 = vst.msk [vmem:[%s297 + $0x8] sm:$0xff] %vm629, %v586
        %632 = vst.msk [vmem:[%s297 + $0x10] sm:$0xff] %vm629, %v589
        %633 = vst.msk [vmem:[%s297 + $0x18] sm:$0xff] %vm629, %v592
        %634 = vst.msk [vmem:[%s297 + $0x20] sm:$0xff] %vm629, %v595
        %635 = vst.msk [vmem:[%s297 + $0x28] sm:$0xff] %vm629, %v598
        %636 = vst.msk [vmem:[%s297 + $0x30] sm:$0xff] %vm629, %v601
        %637 = vst.msk [vmem:[%s297 + $0x38] sm:$0xff] %vm629, %v604
        %638 = vst.msk [vmem:[%s297 + $0x40] sm:$0xff] %vm629, %v607
        %639 = vst.msk [vmem:[%s297 + $0x48] sm:$0xff] %vm629, %v610
        %640 = vst.msk [vmem:[%s297 + $0x50] sm:$0xff] %vm629, %v613
        %641 = vst.msk [vmem:[%s297 + $0x58] sm:$0xff] %vm629, %v616
        %642 = vst.msk [vmem:[%s297 + $0x60] sm:$0xff] %vm629, %v619
        %643 = vst.msk [vmem:[%s297 + $0x68] sm:$0xff] %vm629, %v622
        %644 = vst.msk [vmem:[%s297 + $0x70] sm:$0xff] %vm629, %v625
        %645 = vst.msk [vmem:[%s297 + $0x78] sm:$0xff] %vm629, %v628
        %s646 = scalar_lea.vmem %s280, 128 [#allocation2]
        %v647 = vld [vmem:[%s646] sm:$0xff]
        %v648 = vld [vmem:[%s646 + $0x8] sm:$0xff]
        %v649 = vld [vmem:[%s646 + $0x10] sm:$0xff]
        %v650 = vld [vmem:[%s646 + $0x18] sm:$0xff]
        %v651 = vld [vmem:[%s646 + $0x20] sm:$0xff]
        %v652 = vld [vmem:[%s646 + $0x28] sm:$0xff]
        %v653 = vld [vmem:[%s646 + $0x30] sm:$0xff]
        %v654 = vld [vmem:[%s646 + $0x38] sm:$0xff]
        %v655 = vld [vmem:[%s646 + $0x40] sm:$0xff]
        %v656 = vld [vmem:[%s646 + $0x48] sm:$0xff]
        %v657 = vld [vmem:[%s646 + $0x50] sm:$0xff]
        %v658 = vld [vmem:[%s646 + $0x58] sm:$0xff]
        %v659 = vld [vmem:[%s646 + $0x60] sm:$0xff]
        %v660 = vld [vmem:[%s646 + $0x68] sm:$0xff]
        %v661 = vld [vmem:[%s646 + $0x70] sm:$0xff]
        %v662 = vld [vmem:[%s646 + $0x78] sm:$0xff]
        %s663 = scalar_lea.vmem %s1, 4
        %v664 = vld [vmem:[%s663] sm:$0xf]
        %v665 = vperm.slane %v664, 0
        %v666 = vmul.f32 %v647, %v665
        %v667 = vmul.f32 %v648, %v665
        %v668 = vmul.f32 %v649, %v665
        %v669 = vmul.f32 %v650, %v665
        %v670 = vmul.f32 %v651, %v665
        %v671 = vmul.f32 %v652, %v665
        %v672 = vmul.f32 %v653, %v665
        %v673 = vmul.f32 %v654, %v665
        %v674 = vmul.f32 %v655, %v665
        %v675 = vmul.f32 %v656, %v665
        %v676 = vmul.f32 %v657, %v665
        %v677 = vmul.f32 %v658, %v665
        %v678 = vmul.f32 %v659, %v665
        %v679 = vmul.f32 %v660, %v665
        %v680 = vmul.f32 %v661, %v665
        %v681 = vmul.f32 %v662, %v665
        %v682 = vsel %vm334, %v666, 0.0
        %683 = vadd.xlane.f32.xlu0 %v682
        %v684 = vpop.xlane.xlu0 %683
        %v685 = vsel %vm334, %v667, 0.0
        %686 = vadd.xlane.f32.xlu0 %v685
        %v687 = vpop.xlane.xlu0 %686
        %v688 = vsel %vm334, %v668, 0.0
        %689 = vadd.xlane.f32.xlu0 %v688
        %v690 = vpop.xlane.xlu0 %689
        %v691 = vsel %vm334, %v669, 0.0
        %692 = vadd.xlane.f32.xlu0 %v691
        %v693 = vpop.xlane.xlu0 %692
        %v694 = vsel %vm334, %v670, 0.0
        %695 = vadd.xlane.f32.xlu0 %v694
        %v696 = vpop.xlane.xlu0 %695
        %v697 = vsel %vm334, %v671, 0.0
        %698 = vadd.xlane.f32.xlu0 %v697
        %v699 = vpop.xlane.xlu0 %698
        %v700 = vsel %vm334, %v672, 0.0
        %701 = vadd.xlane.f32.xlu0 %v700
        %v702 = vpop.xlane.xlu0 %701
        %v703 = vsel %vm334, %v673, 0.0
        %704 = vadd.xlane.f32.xlu0 %v703
        %v705 = vpop.xlane.xlu0 %704
        %v706 = vsel %vm334, %v674, 0.0
        %707 = vadd.xlane.f32.xlu0 %v706
        %v708 = vpop.xlane.xlu0 %707
        %v709 = vsel %vm334, %v675, 0.0
        %710 = vadd.xlane.f32.xlu0 %v709
        %v711 = vpop.xlane.xlu0 %710
        %v712 = vsel %vm334, %v676, 0.0
        %713 = vadd.xlane.f32.xlu0 %v712
        %v714 = vpop.xlane.xlu0 %713
        %v715 = vsel %vm334, %v677, 0.0
        %716 = vadd.xlane.f32.xlu0 %v715
        %v717 = vpop.xlane.xlu0 %716
        %v718 = vsel %vm334, %v678, 0.0
        %719 = vadd.xlane.f32.xlu0 %v718
        %v720 = vpop.xlane.xlu0 %719
        %v721 = vsel %vm334, %v679, 0.0
        %722 = vadd.xlane.f32.xlu0 %v721
        %v723 = vpop.xlane.xlu0 %722
        %v724 = vsel %vm334, %v680, 0.0
        %725 = vadd.xlane.f32.xlu0 %v724
        %v726 = vpop.xlane.xlu0 %725
        %v727 = vsel %vm334, %v681, 0.0
        %728 = vadd.xlane.f32.xlu0 %v727
        %v729 = vpop.xlane.xlu0 %728
        %s730 = scalar_lea.vmem %s297, 128 [#allocation3]
        %731 = vst.msk [vmem:[%s730] sm:$0xff] %vm383, %v684
        %732 = vst.msk [vmem:[%s730 + $0x8] sm:$0xff] %vm383, %v687
        %733 = vst.msk [vmem:[%s730 + $0x10] sm:$0xff] %vm383, %v690
        %734 = vst.msk [vmem:[%s730 + $0x18] sm:$0xff] %vm383, %v693
        %735 = vst.msk [vmem:[%s730 + $0x20] sm:$0xff] %vm383, %v696
        %736 = vst.msk [vmem:[%s730 + $0x28] sm:$0xff] %vm383, %v699
        %737 = vst.msk [vmem:[%s730 + $0x30] sm:$0xff] %vm383, %v702
        %738 = vst.msk [vmem:[%s730 + $0x38] sm:$0xff] %vm383, %v705
        %739 = vst.msk [vmem:[%s730 + $0x40] sm:$0xff] %vm383, %v708
        %740 = vst.msk [vmem:[%s730 + $0x48] sm:$0xff] %vm383, %v711
        %741 = vst.msk [vmem:[%s730 + $0x50] sm:$0xff] %vm383, %v714
        %742 = vst.msk [vmem:[%s730 + $0x58] sm:$0xff] %vm383, %v717
        %743 = vst.msk [vmem:[%s730 + $0x60] sm:$0xff] %vm383, %v720
        %744 = vst.msk [vmem:[%s730 + $0x68] sm:$0xff] %vm383, %v723
        %745 = vst.msk [vmem:[%s730 + $0x70] sm:$0xff] %vm383, %v726
        %746 = vst.msk [vmem:[%s730 + $0x78] sm:$0xff] %vm383, %v729
        %v747 = vperm.slane %v664, 1
        %v748 = vmul.f32 %v647, %v747
        %v749 = vmul.f32 %v648, %v747
        %v750 = vmul.f32 %v649, %v747
        %v751 = vmul.f32 %v650, %v747
        %v752 = vmul.f32 %v651, %v747
        %v753 = vmul.f32 %v652, %v747
        %v754 = vmul.f32 %v653, %v747
        %v755 = vmul.f32 %v654, %v747
        %v756 = vmul.f32 %v655, %v747
        %v757 = vmul.f32 %v656, %v747
        %v758 = vmul.f32 %v657, %v747
        %v759 = vmul.f32 %v658, %v747
        %v760 = vmul.f32 %v659, %v747
        %v761 = vmul.f32 %v660, %v747
        %v762 = vmul.f32 %v661, %v747
        %v763 = vmul.f32 %v662, %v747
        %v764 = vsel %vm334, %v748, 0.0
        %765 = vadd.xlane.f32.xlu0 %v764
        %v766 = vpop.xlane.xlu0 %765
        %v767 = vsel %vm334, %v749, 0.0
        %768 = vadd.xlane.f32.xlu0 %v767
        %v769 = vpop.xlane.xlu0 %768
        %v770 = vsel %vm334, %v750, 0.0
        %771 = vadd.xlane.f32.xlu0 %v770
        %v772 = vpop.xlane.xlu0 %771
        %v773 = vsel %vm334, %v751, 0.0
        %774 = vadd.xlane.f32.xlu0 %v773
        %v775 = vpop.xlane.xlu0 %774
        %v776 = vsel %vm334, %v752, 0.0
        %777 = vadd.xlane.f32.xlu0 %v776
        %v778 = vpop.xlane.xlu0 %777
        %v779 = vsel %vm334, %v753, 0.0
        %780 = vadd.xlane.f32.xlu0 %v779
        %v781 = vpop.xlane.xlu0 %780
        %v782 = vsel %vm334, %v754, 0.0
        %783 = vadd.xlane.f32.xlu0 %v782
        %v784 = vpop.xlane.xlu0 %783
        %v785 = vsel %vm334, %v755, 0.0
        %786 = vadd.xlane.f32.xlu0 %v785
        %v787 = vpop.xlane.xlu0 %786
        %v788 = vsel %vm334, %v756, 0.0
        %789 = vadd.xlane.f32.xlu0 %v788
        %v790 = vpop.xlane.xlu0 %789
        %v791 = vsel %vm334, %v757, 0.0
        %792 = vadd.xlane.f32.xlu0 %v791
        %v793 = vpop.xlane.xlu0 %792
        %v794 = vsel %vm334, %v758, 0.0
        %795 = vadd.xlane.f32.xlu0 %v794
        %v796 = vpop.xlane.xlu0 %795
        %v797 = vsel %vm334, %v759, 0.0
        %798 = vadd.xlane.f32.xlu0 %v797
        %v799 = vpop.xlane.xlu0 %798
        %v800 = vsel %vm334, %v760, 0.0
        %801 = vadd.xlane.f32.xlu0 %v800
        %v802 = vpop.xlane.xlu0 %801
        %v803 = vsel %vm334, %v761, 0.0
        %804 = vadd.xlane.f32.xlu0 %v803
        %v805 = vpop.xlane.xlu0 %804
        %v806 = vsel %vm334, %v762, 0.0
        %807 = vadd.xlane.f32.xlu0 %v806
        %v808 = vpop.xlane.xlu0 %807
        %v809 = vsel %vm334, %v763, 0.0
        %810 = vadd.xlane.f32.xlu0 %v809
        %v811 = vpop.xlane.xlu0 %810
        %812 = vst.msk [vmem:[%s730] sm:$0xff] %vm465, %v766
        %813 = vst.msk [vmem:[%s730 + $0x8] sm:$0xff] %vm465, %v769
        %814 = vst.msk [vmem:[%s730 + $0x10] sm:$0xff] %vm465, %v772
        %815 = vst.msk [vmem:[%s730 + $0x18] sm:$0xff] %vm465, %v775
        %816 = vst.msk [vmem:[%s730 + $0x20] sm:$0xff] %vm465, %v778
        %817 = vst.msk [vmem:[%s730 + $0x28] sm:$0xff] %vm465, %v781
        %818 = vst.msk [vmem:[%s730 + $0x30] sm:$0xff] %vm465, %v784
        %819 = vst.msk [vmem:[%s730 + $0x38] sm:$0xff] %vm465, %v787
        %820 = vst.msk [vmem:[%s730 + $0x40] sm:$0xff] %vm465, %v790
        %821 = vst.msk [vmem:[%s730 + $0x48] sm:$0xff] %vm465, %v793
        %822 = vst.msk [vmem:[%s730 + $0x50] sm:$0xff] %vm465, %v796
        %823 = vst.msk [vmem:[%s730 + $0x58] sm:$0xff] %vm465, %v799
        %824 = vst.msk [vmem:[%s730 + $0x60] sm:$0xff] %vm465, %v802
        %825 = vst.msk [vmem:[%s730 + $0x68] sm:$0xff] %vm465, %v805
        %826 = vst.msk [vmem:[%s730 + $0x70] sm:$0xff] %vm465, %v808
        %827 = vst.msk [vmem:[%s730 + $0x78] sm:$0xff] %vm465, %v811
        %v828 = vperm.slane %v664, 2
        %v829 = vmul.f32 %v647, %v828
        %v830 = vmul.f32 %v648, %v828
        %v831 = vmul.f32 %v649, %v828
        %v832 = vmul.f32 %v650, %v828
        %v833 = vmul.f32 %v651, %v828
        %v834 = vmul.f32 %v652, %v828
        %v835 = vmul.f32 %v653, %v828
        %v836 = vmul.f32 %v654, %v828
        %v837 = vmul.f32 %v655, %v828
        %v838 = vmul.f32 %v656, %v828
        %v839 = vmul.f32 %v657, %v828
        %v840 = vmul.f32 %v658, %v828
        %v841 = vmul.f32 %v659, %v828
        %v842 = vmul.f32 %v660, %v828
        %v843 = vmul.f32 %v661, %v828
        %v844 = vmul.f32 %v662, %v828
        %v845 = vsel %vm334, %v829, 0.0
        %846 = vadd.xlane.f32.xlu0 %v845
        %v847 = vpop.xlane.xlu0 %846
        %v848 = vsel %vm334, %v830, 0.0
        %849 = vadd.xlane.f32.xlu0 %v848
        %v850 = vpop.xlane.xlu0 %849
        %v851 = vsel %vm334, %v831, 0.0
        %852 = vadd.xlane.f32.xlu0 %v851
        %v853 = vpop.xlane.xlu0 %852
        %v854 = vsel %vm334, %v832, 0.0
        %855 = vadd.xlane.f32.xlu0 %v854
        %v856 = vpop.xlane.xlu0 %855
        %v857 = vsel %vm334, %v833, 0.0
        %858 = vadd.xlane.f32.xlu0 %v857
        %v859 = vpop.xlane.xlu0 %858
        %v860 = vsel %vm334, %v834, 0.0
        %861 = vadd.xlane.f32.xlu0 %v860
        %v862 = vpop.xlane.xlu0 %861
        %v863 = vsel %vm334, %v835, 0.0
        %864 = vadd.xlane.f32.xlu0 %v863
        %v865 = vpop.xlane.xlu0 %864
        %v866 = vsel %vm334, %v836, 0.0
        %867 = vadd.xlane.f32.xlu0 %v866
        %v868 = vpop.xlane.xlu0 %867
        %v869 = vsel %vm334, %v837, 0.0
        %870 = vadd.xlane.f32.xlu0 %v869
        %v871 = vpop.xlane.xlu0 %870
        %v872 = vsel %vm334, %v838, 0.0
        %873 = vadd.xlane.f32.xlu0 %v872
        %v874 = vpop.xlane.xlu0 %873
        %v875 = vsel %vm334, %v839, 0.0
        %876 = vadd.xlane.f32.xlu0 %v875
        %v877 = vpop.xlane.xlu0 %876
        %v878 = vsel %vm334, %v840, 0.0
        %879 = vadd.xlane.f32.xlu0 %v878
        %v880 = vpop.xlane.xlu0 %879
        %v881 = vsel %vm334, %v841, 0.0
        %882 = vadd.xlane.f32.xlu0 %v881
        %v883 = vpop.xlane.xlu0 %882
        %v884 = vsel %vm334, %v842, 0.0
        %885 = vadd.xlane.f32.xlu0 %v884
        %v886 = vpop.xlane.xlu0 %885
        %v887 = vsel %vm334, %v843, 0.0
        %888 = vadd.xlane.f32.xlu0 %v887
        %v889 = vpop.xlane.xlu0 %888
        %v890 = vsel %vm334, %v844, 0.0
        %891 = vadd.xlane.f32.xlu0 %v890
        %v892 = vpop.xlane.xlu0 %891
        %893 = vst.msk [vmem:[%s730] sm:$0xff] %vm547, %v847
        %894 = vst.msk [vmem:[%s730 + $0x8] sm:$0xff] %vm547, %v850
        %895 = vst.msk [vmem:[%s730 + $0x10] sm:$0xff] %vm547, %v853
        %896 = vst.msk [vmem:[%s730 + $0x18] sm:$0xff] %vm547, %v856
        %897 = vst.msk [vmem:[%s730 + $0x20] sm:$0xff] %vm547, %v859
        %898 = vst.msk [vmem:[%s730 + $0x28] sm:$0xff] %vm547, %v862
        %899 = vst.msk [vmem:[%s730 + $0x30] sm:$0xff] %vm547, %v865
        %900 = vst.msk [vmem:[%s730 + $0x38] sm:$0xff] %vm547, %v868
        %901 = vst.msk [vmem:[%s730 + $0x40] sm:$0xff] %vm547, %v871
        %902 = vst.msk [vmem:[%s730 + $0x48] sm:$0xff] %vm547, %v874
        %903 = vst.msk [vmem:[%s730 + $0x50] sm:$0xff] %vm547, %v877
        %904 = vst.msk [vmem:[%s730 + $0x58] sm:$0xff] %vm547, %v880
        %905 = vst.msk [vmem:[%s730 + $0x60] sm:$0xff] %vm547, %v883
        %906 = vst.msk [vmem:[%s730 + $0x68] sm:$0xff] %vm547, %v886
        %907 = vst.msk [vmem:[%s730 + $0x70] sm:$0xff] %vm547, %v889
        %908 = vst.msk [vmem:[%s730 + $0x78] sm:$0xff] %vm547, %v892
        %v909 = vperm.slane %v664, 3
        %v910 = vmul.f32 %v647, %v909
        %v911 = vmul.f32 %v648, %v909
        %v912 = vmul.f32 %v649, %v909
        %v913 = vmul.f32 %v650, %v909
        %v914 = vmul.f32 %v651, %v909
        %v915 = vmul.f32 %v652, %v909
        %v916 = vmul.f32 %v653, %v909
        %v917 = vmul.f32 %v654, %v909
        %v918 = vmul.f32 %v655, %v909
        %v919 = vmul.f32 %v656, %v909
        %v920 = vmul.f32 %v657, %v909
        %v921 = vmul.f32 %v658, %v909
        %v922 = vmul.f32 %v659, %v909
        %v923 = vmul.f32 %v660, %v909
        %v924 = vmul.f32 %v661, %v909
        %v925 = vmul.f32 %v662, %v909
        %v926 = vsel %vm334, %v910, 0.0
        %927 = vadd.xlane.f32.xlu0 %v926
        %v928 = vpop.xlane.xlu0 %927
        %v929 = vsel %vm334, %v911, 0.0
        %930 = vadd.xlane.f32.xlu0 %v929
        %v931 = vpop.xlane.xlu0 %930
        %v932 = vsel %vm334, %v912, 0.0
        %933 = vadd.xlane.f32.xlu0 %v932
        %v934 = vpop.xlane.xlu0 %933
        %v935 = vsel %vm334, %v913, 0.0
        %936 = vadd.xlane.f32.xlu0 %v935
        %v937 = vpop.xlane.xlu0 %936
        %v938 = vsel %vm334, %v914, 0.0
        %939 = vadd.xlane.f32.xlu0 %v938
        %v940 = vpop.xlane.xlu0 %939
        %v941 = vsel %vm334, %v915, 0.0
        %942 = vadd.xlane.f32.xlu0 %v941
        %v943 = vpop.xlane.xlu0 %942
        %v944 = vsel %vm334, %v916, 0.0
        %945 = vadd.xlane.f32.xlu0 %v944
        %v946 = vpop.xlane.xlu0 %945
        %v947 = vsel %vm334, %v917, 0.0
        %948 = vadd.xlane.f32.xlu0 %v947
        %v949 = vpop.xlane.xlu0 %948
        %v950 = vsel %vm334, %v918, 0.0
        %951 = vadd.xlane.f32.xlu0 %v950
        %v952 = vpop.xlane.xlu0 %951
        %v953 = vsel %vm334, %v919, 0.0
        %954 = vadd.xlane.f32.xlu0 %v953
        %v955 = vpop.xlane.xlu0 %954
        %v956 = vsel %vm334, %v920, 0.0
        %957 = vadd.xlane.f32.xlu0 %v956
        %v958 = vpop.xlane.xlu0 %957
        %v959 = vsel %vm334, %v921, 0.0
        %960 = vadd.xlane.f32.xlu0 %v959
        %v961 = vpop.xlane.xlu0 %960
        %v962 = vsel %vm334, %v922, 0.0
        %963 = vadd.xlane.f32.xlu0 %v962
        %v964 = vpop.xlane.xlu0 %963
        %v965 = vsel %vm334, %v923, 0.0
        %966 = vadd.xlane.f32.xlu0 %v965
        %v967 = vpop.xlane.xlu0 %966
        %v968 = vsel %vm334, %v924, 0.0
        %969 = vadd.xlane.f32.xlu0 %v968
        %v970 = vpop.xlane.xlu0 %969
        %v971 = vsel %vm334, %v925, 0.0
        %972 = vadd.xlane.f32.xlu0 %v971
        %v973 = vpop.xlane.xlu0 %972
        %974 = vst.msk [vmem:[%s730] sm:$0xff] %vm629, %v928
        %975 = vst.msk [vmem:[%s730 + $0x8] sm:$0xff] %vm629, %v931
        %976 = vst.msk [vmem:[%s730 + $0x10] sm:$0xff] %vm629, %v934
        %977 = vst.msk [vmem:[%s730 + $0x18] sm:$0xff] %vm629, %v937
        %978 = vst.msk [vmem:[%s730 + $0x20] sm:$0xff] %vm629, %v940
        %979 = vst.msk [vmem:[%s730 + $0x28] sm:$0xff] %vm629, %v943
        %980 = vst.msk [vmem:[%s730 + $0x30] sm:$0xff] %vm629, %v946
        %981 = vst.msk [vmem:[%s730 + $0x38] sm:$0xff] %vm629, %v949
        %982 = vst.msk [vmem:[%s730 + $0x40] sm:$0xff] %vm629, %v952
        %983 = vst.msk [vmem:[%s730 + $0x48] sm:$0xff] %vm629, %v955
        %984 = vst.msk [vmem:[%s730 + $0x50] sm:$0xff] %vm629, %v958
        %985 = vst.msk [vmem:[%s730 + $0x58] sm:$0xff] %vm629, %v961
        %986 = vst.msk [vmem:[%s730 + $0x60] sm:$0xff] %vm629, %v964
        %987 = vst.msk [vmem:[%s730 + $0x68] sm:$0xff] %vm629, %v967
        %988 = vst.msk [vmem:[%s730 + $0x70] sm:$0xff] %vm629, %v970
        %989 = vst.msk [vmem:[%s730 + $0x78] sm:$0xff] %vm629, %v973
        %s990 = sand.u32 %s68, 1
        %s991 = sand.u32 %s68, 1
        %s992 = smul.addr %s991, 256
        %s993 = scalar_lea.vmem [#allocation3], %s992
        // Predicated region
        $region67: #{_forward_nomask.3} parent=61 // pred_check
          %p994 = pneg %p78
        $region68: #{_forward_nomask.3} parent=61 // pred_check_branch
          %996 = sbr.rel (%p994) target = $region70
        $region69: #{_forward_nomask.3} parent=61 // pred_region
          %s997 = smul.u32 16, %s13
          %s998 = smul.addr %s997, 8
          %s999 = scalar_lea.vmem %s2, %s998
          // Predicated region
          $region71: #{_forward_nomask.3} parent=69 // pred_check
            _
          $region72: #{_forward_nomask.3} parent=69 // pred_check_branch
            %1001 = sbr.rel (0) target = $region74
          $region73: #{_forward_nomask.3} parent=69 // pred_region
            // Predicated region
            $region75: #{_forward_nomask.3} parent=73 // pred_check
              _
            $region76: #{_forward_nomask.3} parent=73 // pred_check_branch
              %1003 = sbr.rel (0) target = $region78
            $region77: #{_forward_nomask.3} parent=73 // pred_region
              // Predicated region
              $region90: #{_forward_nomask.3} parent=77 // pred_check
                _
              $region91: #{_forward_nomask.3} parent=77 // pred_check_branch
                %1081 = sbr.rel (0) target = $region93
              $region92: #{_forward_nomask.3} parent=77 // pred_region
                loop: start=0, step=1, limit=1
                $region94: #{_forward_nomask.3} parent=92 // loop_pre_header
                  _
                $region95: #{_forward_nomask.3} parent=92 // loop_header
                  %s1083 = sphi 0, %s1087
                  %p1084 = scmp.ge.s32.totalorder %s1083, 1
                  %s1088 = sphi %s993, %s993
                  %s1089 = sphi %s999, %s999
                $region96: #{_forward_nomask.3} parent=92 // loop_header_branch
                  %1086 = sbr.rel (%p1084) target = $region100
                $region97: #{_forward_nomask.3} parent=92 // loop_body
                  %v1090 = vld [vmem:[%s1088] sm:$0xff]
                  %1091 = vst [vmem:[%s1089] sm:$0xff] %v1090
                  %v1092 = vld [vmem:[%s1088 + $0x8] sm:$0xff]
                  %1093 = vst [vmem:[%s1089 + $0x8] sm:$0xff] %v1092
                  %v1094 = vld [vmem:[%s1088 + $0x10] sm:$0xff]
                  %1095 = vst [vmem:[%s1089 + $0x10] sm:$0xff] %v1094
                  %v1096 = vld [vmem:[%s1088 + $0x18] sm:$0xff]
                  %1097 = vst [vmem:[%s1089 + $0x18] sm:$0xff] %v1096
                  %v1098 = vld [vmem:[%s1088 + $0x20] sm:$0xff]
                  %1099 = vst [vmem:[%s1089 + $0x20] sm:$0xff] %v1098
                  %v1100 = vld [vmem:[%s1088 + $0x28] sm:$0xff]
                  %1101 = vst [vmem:[%s1089 + $0x28] sm:$0xff] %v1100
                  %v1102 = vld [vmem:[%s1088 + $0x30] sm:$0xff]
                  %1103 = vst [vmem:[%s1089 + $0x30] sm:$0xff] %v1102
                  %v1104 = vld [vmem:[%s1088 + $0x38] sm:$0xff]
                  %1105 = vst [vmem:[%s1089 + $0x38] sm:$0xff] %v1104
                  %v1106 = vld [vmem:[%s1088 + $0x40] sm:$0xff]
                  %1107 = vst [vmem:[%s1089 + $0x40] sm:$0xff] %v1106
                  %v1108 = vld [vmem:[%s1088 + $0x48] sm:$0xff]
                  %1109 = vst [vmem:[%s1089 + $0x48] sm:$0xff] %v1108
                  %v1110 = vld [vmem:[%s1088 + $0x50] sm:$0xff]
                  %1111 = vst [vmem:[%s1089 + $0x50] sm:$0xff] %v1110
                  %v1112 = vld [vmem:[%s1088 + $0x58] sm:$0xff]
                  %1113 = vst [vmem:[%s1089 + $0x58] sm:$0xff] %v1112
                  %v1114 = vld [vmem:[%s1088 + $0x60] sm:$0xff]
                  %1115 = vst [vmem:[%s1089 + $0x60] sm:$0xff] %v1114
                  %v1116 = vld [vmem:[%s1088 + $0x68] sm:$0xff]
                  %1117 = vst [vmem:[%s1089 + $0x68] sm:$0xff] %v1116
                  %v1118 = vld [vmem:[%s1088 + $0x70] sm:$0xff]
                  %1119 = vst [vmem:[%s1089 + $0x70] sm:$0xff] %v1118
                  %v1120 = vld [vmem:[%s1088 + $0x78] sm:$0xff]
                  %1121 = vst [vmem:[%s1089 + $0x78] sm:$0xff] %v1120
                  %v1122 = vld [vmem:[%s1088 + $0x80] sm:$0xff]
                  %1123 = vst [vmem:[%s1089 + $0x100] sm:$0xff] %v1122
                  %v1124 = vld [vmem:[%s1088 + $0x88] sm:$0xff]
                  %1125 = vst [vmem:[%s1089 + $0x108] sm:$0xff] %v1124
                  %v1126 = vld [vmem:[%s1088 + $0x90] sm:$0xff]
                  %1127 = vst [vmem:[%s1089 + $0x110] sm:$0xff] %v1126
                  %v1128 = vld [vmem:[%s1088 + $0x98] sm:$0xff]
                  %1129 = vst [vmem:[%s1089 + $0x118] sm:$0xff] %v1128
                  %v1130 = vld [vmem:[%s1088 + $0xa0] sm:$0xff]
                  %1131 = vst [vmem:[%s1089 + $0x120] sm:$0xff] %v1130
                  %v1132 = vld [vmem:[%s1088 + $0xa8] sm:$0xff]
                  %1133 = vst [vmem:[%s1089 + $0x128] sm:$0xff] %v1132
                  %v1134 = vld [vmem:[%s1088 + $0xb0] sm:$0xff]
                  %1135 = vst [vmem:[%s1089 + $0x130] sm:$0xff] %v1134
                  %v1136 = vld [vmem:[%s1088 + $0xb8] sm:$0xff]
                  %1137 = vst [vmem:[%s1089 + $0x138] sm:$0xff] %v1136
                  %v1138 = vld [vmem:[%s1088 + $0xc0] sm:$0xff]
                  %1139 = vst [vmem:[%s1089 + $0x140] sm:$0xff] %v1138
                  %v1140 = vld [vmem:[%s1088 + $0xc8] sm:$0xff]
                  %1141 = vst [vmem:[%s1089 + $0x148] sm:$0xff] %v1140
                  %v1142 = vld [vmem:[%s1088 + $0xd0] sm:$0xff]
                  %1143 = vst [vmem:[%s1089 + $0x150] sm:$0xff] %v1142
                  %v1144 = vld [vmem:[%s1088 + $0xd8] sm:$0xff]
                  %1145 = vst [vmem:[%s1089 + $0x158] sm:$0xff] %v1144
                  %v1146 = vld [vmem:[%s1088 + $0xe0] sm:$0xff]
                  %1147 = vst [vmem:[%s1089 + $0x160] sm:$0xff] %v1146
                  %v1148 = vld [vmem:[%s1088 + $0xe8] sm:$0xff]
                  %1149 = vst [vmem:[%s1089 + $0x168] sm:$0xff] %v1148
                  %v1150 = vld [vmem:[%s1088 + $0xf0] sm:$0xff]
                  %1151 = vst [vmem:[%s1089 + $0x170] sm:$0xff] %v1150
                  %v1152 = vld [vmem:[%s1088 + $0xf8] sm:$0xff]
                  %1153 = vst [vmem:[%s1089 + $0x178] sm:$0xff] %v1152
                $region98: #{_forward_nomask.3} parent=92 // loop_footer
                  %s1087 = sadd.s32 1, %s1083
                $region99: #{_forward_nomask.3} parent=92 // loop_footer_branch
                  %1082 = sbr.rel target = $region95
                $region100: #{_forward_nomask.3} parent=92 // loop_exit
                  _
              $region93: #{_forward_nomask.3} parent=77 // pred_fallthru
                _
              // Predicated region
              $region101: #{_forward_nomask.3} parent=77 // pred_check
                _
              $region102: #{_forward_nomask.3} parent=77 // pred_check_branch
                %1155 = sbr.rel target = $region104
              $region103: #{_forward_nomask.3} parent=77 // pred_region
                _
              $region104: #{_forward_nomask.3} parent=77 // pred_fallthru
                _
            $region78: #{_forward_nomask.3} parent=73 // pred_fallthru
              _
            // Predicated region
            $region79: #{_forward_nomask.3} parent=73 // pred_check
              _
            $region80: #{_forward_nomask.3} parent=73 // pred_check_branch
              %1005 = sbr.rel target = $region82
            $region81: #{_forward_nomask.3} parent=73 // pred_region
              %s1007 = ssub.s32 256, 1
              loop: start=0, step=1, limit=1
              $region83: #{_forward_nomask.3} parent=81 // loop_pre_header
                _
              $region84: #{_forward_nomask.3} parent=81 // loop_header
                %s1009 = sphi 0, %s1013
                %p1010 = scmp.ge.s32.totalorder %s1009, 1
                %s1014 = sphi %s993, %s993
                %s1015 = sphi %s999, %s999
              $region85: #{_forward_nomask.3} parent=81 // loop_header_branch
                %1012 = sbr.rel (%p1010) target = $region89
              $region86: #{_forward_nomask.3} parent=81 // loop_body
                %v1016 = vld [vmem:[%s1014] sm:%s1007]
                %1017 = vst [vmem:[%s1015] sm:%s1007] %v1016
                %v1018 = vld [vmem:[%s1014 + $0x8] sm:%s1007]
                %1019 = vst [vmem:[%s1015 + $0x8] sm:%s1007] %v1018
                %v1020 = vld [vmem:[%s1014 + $0x10] sm:%s1007]
                %1021 = vst [vmem:[%s1015 + $0x10] sm:%s1007] %v1020
                %v1022 = vld [vmem:[%s1014 + $0x18] sm:%s1007]
                %1023 = vst [vmem:[%s1015 + $0x18] sm:%s1007] %v1022
                %v1024 = vld [vmem:[%s1014 + $0x20] sm:%s1007]
                %1025 = vst [vmem:[%s1015 + $0x20] sm:%s1007] %v1024
                %v1026 = vld [vmem:[%s1014 + $0x28] sm:%s1007]
                %1027 = vst [vmem:[%s1015 + $0x28] sm:%s1007] %v1026
                %v1028 = vld [vmem:[%s1014 + $0x30] sm:%s1007]
                %1029 = vst [vmem:[%s1015 + $0x30] sm:%s1007] %v1028
                %v1030 = vld [vmem:[%s1014 + $0x38] sm:%s1007]
                %1031 = vst [vmem:[%s1015 + $0x38] sm:%s1007] %v1030
                %v1032 = vld [vmem:[%s1014 + $0x40] sm:%s1007]
                %1033 = vst [vmem:[%s1015 + $0x40] sm:%s1007] %v1032
                %v1034 = vld [vmem:[%s1014 + $0x48] sm:%s1007]
                %1035 = vst [vmem:[%s1015 + $0x48] sm:%s1007] %v1034
                %v1036 = vld [vmem:[%s1014 + $0x50] sm:%s1007]
                %1037 = vst [vmem:[%s1015 + $0x50] sm:%s1007] %v1036
                %v1038 = vld [vmem:[%s1014 + $0x58] sm:%s1007]
                %1039 = vst [vmem:[%s1015 + $0x58] sm:%s1007] %v1038
                %v1040 = vld [vmem:[%s1014 + $0x60] sm:%s1007]
                %1041 = vst [vmem:[%s1015 + $0x60] sm:%s1007] %v1040
                %v1042 = vld [vmem:[%s1014 + $0x68] sm:%s1007]
                %1043 = vst [vmem:[%s1015 + $0x68] sm:%s1007] %v1042
                %v1044 = vld [vmem:[%s1014 + $0x70] sm:%s1007]
                %1045 = vst [vmem:[%s1015 + $0x70] sm:%s1007] %v1044
                %v1046 = vld [vmem:[%s1014 + $0x78] sm:%s1007]
                %1047 = vst [vmem:[%s1015 + $0x78] sm:%s1007] %v1046
                %v1048 = vld [vmem:[%s1014 + $0x80] sm:%s1007]
                %1049 = vst [vmem:[%s1015 + $0x100] sm:%s1007] %v1048
                %v1050 = vld [vmem:[%s1014 + $0x88] sm:%s1007]
                %1051 = vst [vmem:[%s1015 + $0x108] sm:%s1007] %v1050
                %v1052 = vld [vmem:[%s1014 + $0x90] sm:%s1007]
                %1053 = vst [vmem:[%s1015 + $0x110] sm:%s1007] %v1052
                %v1054 = vld [vmem:[%s1014 + $0x98] sm:%s1007]
                %1055 = vst [vmem:[%s1015 + $0x118] sm:%s1007] %v1054
                %v1056 = vld [vmem:[%s1014 + $0xa0] sm:%s1007]
                %1057 = vst [vmem:[%s1015 + $0x120] sm:%s1007] %v1056
                %v1058 = vld [vmem:[%s1014 + $0xa8] sm:%s1007]
                %1059 = vst [vmem:[%s1015 + $0x128] sm:%s1007] %v1058
                %v1060 = vld [vmem:[%s1014 + $0xb0] sm:%s1007]
                %1061 = vst [vmem:[%s1015 + $0x130] sm:%s1007] %v1060
                %v1062 = vld [vmem:[%s1014 + $0xb8] sm:%s1007]
                %1063 = vst [vmem:[%s1015 + $0x138] sm:%s1007] %v1062
                %v1064 = vld [vmem:[%s1014 + $0xc0] sm:%s1007]
                %1065 = vst [vmem:[%s1015 + $0x140] sm:%s1007] %v1064
                %v1066 = vld [vmem:[%s1014 + $0xc8] sm:%s1007]
                %1067 = vst [vmem:[%s1015 + $0x148] sm:%s1007] %v1066
                %v1068 = vld [vmem:[%s1014 + $0xd0] sm:%s1007]
                %1069 = vst [vmem:[%s1015 + $0x150] sm:%s1007] %v1068
                %v1070 = vld [vmem:[%s1014 + $0xd8] sm:%s1007]
                %1071 = vst [vmem:[%s1015 + $0x158] sm:%s1007] %v1070
                %v1072 = vld [vmem:[%s1014 + $0xe0] sm:%s1007]
                %1073 = vst [vmem:[%s1015 + $0x160] sm:%s1007] %v1072
                %v1074 = vld [vmem:[%s1014 + $0xe8] sm:%s1007]
                %1075 = vst [vmem:[%s1015 + $0x168] sm:%s1007] %v1074
                %v1076 = vld [vmem:[%s1014 + $0xf0] sm:%s1007]
                %1077 = vst [vmem:[%s1015 + $0x170] sm:%s1007] %v1076
                %v1078 = vld [vmem:[%s1014 + $0xf8] sm:%s1007]
                %1079 = vst [vmem:[%s1015 + $0x178] sm:%s1007] %v1078
              $region87: #{_forward_nomask.3} parent=81 // loop_footer
                %s1013 = sadd.s32 1, %s1009
              $region88: #{_forward_nomask.3} parent=81 // loop_footer_branch
                %1008 = sbr.rel target = $region84
              $region89: #{_forward_nomask.3} parent=81 // loop_exit
                _
            $region82: #{_forward_nomask.3} parent=73 // pred_fallthru
              _
          $region74: #{_forward_nomask.3} parent=69 // pred_fallthru
            _
          %1156 = vnop
        $region70: #{_forward_nomask.3} parent=61 // pred_fallthru
          _
      $region62: #{_forward_nomask.3} parent=5 // pred_fallthru
        _
      %p1157 = scmp.le.s32.totalorder 2, %s8
      // Predicated region
      $region105: #{_forward_nomask.3} parent=5 // pred_check
        %p1158 = pneg %p1157
      $region106: #{_forward_nomask.3} parent=5 // pred_check_branch
        %1160 = sbr.rel (%p1158) target = $region108
      $region107: #{_forward_nomask.3} parent=5 // pred_region
        %s1161 = ssub.s32 %s8, 2
        // Predicated region
        $region109: #{_forward_nomask.3} parent=107 // pred_check
          %p1162 = pneg %p84
        $region110: #{_forward_nomask.3} parent=107 // pred_check_branch
          %1164 = sbr.rel (%p1162) target = $region112
        $region111: #{_forward_nomask.3} parent=107 // pred_region
          %s1165 = sand.u32 %s69, 1
          %s1166 = sand.u32 %s69, 1
          %s1167 = smul.addr %s1166, 256
          %s1168 = scalar_lea.vmem [#allocation3], %s1167
        $region112: #{_forward_nomask.3} parent=107 // pred_fallthru
          _
      $region108: #{_forward_nomask.3} parent=5 // pred_fallthru
        _
    $region6: #{_forward_nomask.3} parent=1 // loop_footer
      %s12 = sadd.s32 1, %s8
    $region7: #{_forward_nomask.3} parent=1 // loop_footer_branch
      %7 = sbr.rel target = $region3
    $region8: #{_forward_nomask.3} parent=1 // loop_exit
      _

</llo_original>
